<compile_context>
chip_gen: v5e
topology: v5e:2x2
jax: 0.10.0
libtpu: 0.0.40
codegen_flags: <defaults>
</compile_context>

<pallas_src>
import functools

import jax
import jax.numpy as jnp
from jax import lax
from jax.experimental import pallas as pl
from jax.experimental.pallas import tpu as pltpu


# ----------------------------- in-kernel helpers -----------------------------

def _group_norm_rows(x, gamma, beta, eps):
    """GroupNorm(num_groups=1) per leading index. x: (G, R, L); gamma/beta: (G, R, 1)."""
    n = x.shape[1] * x.shape[2]
    m = jnp.sum(jnp.sum(x, axis=2, keepdims=True), axis=1, keepdims=True) / n   # (G,1,1)
    d = x - m
    var = jnp.sum(jnp.sum(d * d, axis=2, keepdims=True), axis=1, keepdims=True) / n
    return d * lax.rsqrt(var + eps) * gamma + beta


def _group_norm_2d(x, gamma, beta, eps):
    """GroupNorm(num_groups=1) for one sample. x: (C, L); gamma/beta: (C, 1)."""
    m = jnp.mean(x, keepdims=True)
    d = x - m
    var = jnp.mean(d * d, keepdims=True)
    return d * lax.rsqrt(var + eps) * gamma + beta


# --------------------------------- kernel ------------------------------------

def conv_cross_attention_kernel(x_ref, pw1_w, pw1_b, prelu_a, gn1_g, gn1_b,
                                dw_w, dw_b, gn2_g, gn2_b, res_w, res_b,
                                ln_g, ln_b, out_ref,
                                *, batch, n_head, d_k, d_v, K, dilation, eps):
    x = x_ref[...]                           # (3B, C, L) stacked [q | k | v] over samples
    G, C, L = x.shape

    # ---- three DepthConv1d branches, vectorized over (branch, sample) = leading dim ----
    # 1x1 pointwise conv: (G,H,C) x (G,C,L) -> (G,H,L)  (batched dot_general)
    h = jnp.einsum('ghc,gcl->ghl', pw1_w[...], x,
                   preferred_element_type=jnp.float32) + pw1_b[...]
    h = jnp.where(h > 0, h, prelu_a[0] * h)                     # PReLU #1
    h = _group_norm_rows(h, gn1_g[...], gn1_b[...], eps)        # GroupNorm #1

    # depthwise conv, padding='same': zero-pad the length axis once, then K static
    # lane slices + VPU multiply-accumulate (no MXU shift matmuls, no (L,L) masks).
    Hc = h.shape[1]
    total = dilation * (K - 1)
    left = total // 2
    right = total - left
    if total > 0:
        pieces = []
        if left > 0:
            pieces.append(jnp.zeros((G, Hc, left), jnp.float32))
        pieces.append(h)
        if right > 0:
            pieces.append(jnp.zeros((G, Hc, right), jnp.float32))
        hp = jnp.concatenate(pieces, axis=2)                    # (G, Hc, L+total)
    else:
        hp = h
    acc = jnp.zeros((G, Hc, L), jnp.float32)
    for j in range(K):
        acc = acc + dw_w[j] * hp[:, :, j * dilation:j * dilation + L]   # dw_w[j]: (G,Hc,1)
    h = acc + dw_b[...]
    h = jnp.where(h > 0, h, prelu_a[1] * h)                     # PReLU #2
    h = _group_norm_rows(h, gn2_g[...], gn2_b[...], eps)        # GroupNorm #2

    # 1x1 res_out conv back to C channels: (G,C,H) x (G,H,L) -> (G,C,L)
    y = jnp.einsum('gch,ghl->gcl', res_w[...], h,
                   preferred_element_type=jnp.float32) + res_b[...]

    # ---- multi-head scaled dot-product cross attention (per sample) ----
    inv_temp = 1.0 / (float(d_k) ** 0.5)
    for b in range(batch):
        qc = y[0 * batch + b]                # (C, L) = w_qs output of sample b
        kc = y[1 * batch + b]                # w_ks
        vc = y[2 * batch + b]                # w_vs
        residual = x[2 * batch + b]          # original v of sample b
        heads = []
        for hh in range(n_head):
            qh = qc[:, hh * d_k:(hh + 1) * d_k] * inv_temp      # (C, d_k) static slice
            kh = kc[:, hh * d_k:(hh + 1) * d_k]
            vh = vc[:, hh * d_v:(hh + 1) * d_v]
            logits = lax.dot_general(qh, kh, (((1,), (1,)), ((), ())),
                                     preferred_element_type=jnp.float32)  # (C, C)
            logits = logits - jnp.max(logits, axis=-1, keepdims=True)
            p = jnp.exp(logits)
            p = p * pl.reciprocal(jnp.sum(p, axis=-1, keepdims=True), approx=True)
            heads.append(jnp.dot(p, vh, preferred_element_type=jnp.float32))  # (C, d_v)
        # TODO(synk): nn.Dropout (attention + output) treated as identity (eval mode).
        out = jnp.concatenate(heads, axis=-1) + residual        # (C, L)
        out_ref[b] = _group_norm_2d(out, ln_g[...], ln_b[...], eps)


# --------------------------------- wrapper -----------------------------------

def conv_cross_attention(q, k, v, params, *, n_head, d_k, d_v,
                         kernel_size, dilation, eps=1e-8):
    B, C, L = q.shape
    H = 2 * C
    assert L == n_head * d_k and L == n_head * d_v, \
        "conv length axis must equal n_head*d_k (and n_head*d_v)"

    G = 3 * B
    # Stack the three branch inputs over the leading axis: index = branch*B + sample.
    x = jnp.concatenate([q, k, v], axis=0)                       # (3B, C, L)

    def rep(p):  # per-branch (3, ...) -> per-(branch, sample) (3B, ...)
        return jnp.repeat(p, B, axis=0)

    prelu = jnp.repeat(params['prelu_a'], B, axis=0)             # (3B, 2)
    prelu = jnp.broadcast_to(jnp.transpose(prelu)[:, :, None, None], (2, G, H, 1))
    dw_w = jnp.repeat(jnp.transpose(params['dw_w'], (1, 0, 2, 3)), B, axis=1)  # (K,3B,H,1)

    args = (x,
            rep(params['pw1_w']), rep(params['pw1_b']), prelu,
            rep(params['gn1_g']), rep(params['gn1_b']),
            dw_w, rep(params['dw_b']),
            rep(params['gn2_g']), rep(params['gn2_b']),
            rep(params['res_w']), rep(params['res_b']),
            params['ln_g'], params['ln_b'])

    def full(shape):
        nd = len(shape)
        return pl.BlockSpec(shape, lambda i, _nd=nd: (0,) * _nd)

    in_specs = [full(a.shape) for a in args]
    out_spec = pl.BlockSpec((B, C, L), lambda i: (0, 0, 0))

    kern = functools.partial(conv_cross_attention_kernel, batch=B, n_head=n_head,
                             d_k=d_k, d_v=d_v, K=kernel_size, dilation=dilation, eps=eps)

    # Single invocation: batch folded into the block (everything fits comfortably in VMEM).
    # TODO(synk): on v7x a size>=2 "parallel" grid axis (e.g. over samples) would engage
    # the second TensorCore; at these shapes a single step is faster on v5e/v6e.
    return pl.pallas_call(
        kern,
        out_shape=jax.ShapeDtypeStruct((B, C, L), jnp.float32),
        grid_spec=pltpu.PrefetchScalarGridSpec(
            num_scalar_prefetch=0,
            grid=(1,),
            in_specs=in_specs,
            out_specs=out_spec),
        compiler_params=pltpu.CompilerParams(
            dimension_semantics=("arbitrary",)),
    )(*args)


# ------------------------- deterministic param init --------------------------

def init_params(key, C, H, K):
    ks = jax.random.split(key, 13)

    def nrm(k_, shape, scale=0.2):
        return (scale * jax.random.normal(k_, shape)).astype(jnp.float32)

    return {
        'pw1_w': nrm(ks[0], (3, H, C)),                 # Conv1d(C, 2C, 1) weight (squeezed)
        'pw1_b': nrm(ks[1], (3, H, 1)),
        'prelu_a': (jnp.full((3, 2), 0.25, jnp.float32)
                    + nrm(ks[2], (3, 2), 0.05)),        # PReLU scalars (nonlin1, nonlin2)
        'gn1_g': 1.0 + nrm(ks[3], (3, H, 1), 0.1),
        'gn1_b': nrm(ks[4], (3, H, 1), 0.1),
        'dw_w': nrm(ks[5], (3, K, H, 1), 0.3),          # depthwise Conv1d weight
        'dw_b': nrm(ks[6], (3, H, 1)),
        'gn2_g': 1.0 + nrm(ks[7], (3, H, 1), 0.1),
        'gn2_b': nrm(ks[8], (3, H, 1), 0.1),
        'res_w': nrm(ks[9], (3, C, H)),                 # Conv1d(2C, C, 1) weight (squeezed)
        'res_b': nrm(ks[10], (3, C, 1)),
        'ln_g': 1.0 + nrm(ks[11], (C, 1), 0.1),
        'ln_b': nrm(ks[12], (C, 1), 0.1),
    }


# ----------------------------- pure-JAX reference ----------------------------

def _group_norm_ref(x, gamma, beta, eps):
    m = jnp.mean(x, axis=(1, 2), keepdims=True)
    v = jnp.mean((x - m) ** 2, axis=(1, 2), keepdims=True)
    return (x - m) / jnp.sqrt(v + eps) * gamma[None, :, None] + beta[None, :, None]


def _depthconv_ref(x, br, p, K, dilation, eps):
    h = jnp.einsum('hc,bcl->bhl', p['pw1_w'][br], x) + p['pw1_b'][br][None, :, :]
    h = jnp.where(h > 0, h, p['prelu_a'][br, 0] * h)
    h = _group_norm_ref(h, p['gn1_g'][br, :, 0], p['gn1_b'][br, :, 0], eps)
    L = h.shape[-1]
    total = dilation * (K - 1)
    left = total // 2
    hp = jnp.pad(h, ((0, 0), (0, 0), (left, total - left)))
    acc = jnp.zeros_like(h)
    for j in range(K):
        acc = acc + p['dw_w'][br, j][None, :, :] * hp[:, :, j * dilation:j * dilation + L]
    h = acc + p['dw_b'][br][None, :, :]
    h = jnp.where(h > 0, h, p['prelu_a'][br, 1] * h)
    h = _group_norm_ref(h, p['gn2_g'][br, :, 0], p['gn2_b'][br, :, 0], eps)
    return jnp.einsum('ch,bhl->bcl', p['res_w'][br], h) + p['res_b'][br][None, :, :]


def conv_cross_attention_ref(q, k, v, p, *, n_head, d_k, d_v,
                             kernel_size, dilation, eps=1e-8):
    B, C, L = q.shape
    residual = v
    qc = _depthconv_ref(q, 0, p, kernel_size, dilation, eps)
    kc = _depthconv_ref(k, 1, p, kernel_size, dilation, eps)
    vc = _depthconv_ref(v, 2, p, kernel_size, dilation, eps)
    qh = qc.reshape(B, C, n_head, d_k).transpose(0, 2, 1, 3)
    kh = kc.reshape(B, C, n_head, d_k).transpose(0, 2, 1, 3)
    vh = vc.reshape(B, C, n_head, d_v).transpose(0, 2, 1, 3)
    inv_temp = 1.0 / (float(d_k) ** 0.5)
    attn = jnp.einsum('bhqd,bhkd->bhqk', qh * inv_temp, kh)
    attn = jax.nn.softmax(attn, axis=-1)
    out = jnp.einsum('bhqk,bhkd->bhqd', attn, vh)
    out = out.transpose(0, 2, 1, 3).reshape(B, C, n_head * d_v)
    out = out + residual
    return _group_norm_ref(out, p['ln_g'][:, 0], p['ln_b'][:, 0], eps)


# ----------------------------------- main -------------------------------------

if __name__ == "__main__":
    B, C = 2, 8                 # batch, in_ch (attention sequence axis)
    n_head, d_k = 2, 16
    d_v = d_k
    L = n_head * d_k            # conv "length" axis = 32
    kernel_size, dilation = 3, 1
    H = 2 * C

    key = jax.random.PRNGKey(0)
    kq, kk, kv, kp = jax.random.split(key, 4)
    q = jax.random.normal(kq, (B, C, L), jnp.float32)
    k = jax.random.normal(kk, (B, C, L), jnp.float32)
    v = jax.random.normal(kv, (B, C, L), jnp.float32)
    params = init_params(kp, C, H, kernel_size)

    out = conv_cross_attention(q, k, v, params, n_head=n_head, d_k=d_k, d_v=d_v,
                               kernel_size=kernel_size, dilation=dilation)
    out = jax.block_until_ready(out)

    ref = conv_cross_attention_ref(q, k, v, params, n_head=n_head, d_k=d_k, d_v=d_v,
                                   kernel_size=kernel_size, dilation=dilation)
    ref = jax.block_until_ready(ref)

    assert out.shape == (B, C, L)
    assert bool(jnp.all(jnp.isfinite(out)))
    max_err = float(jnp.max(jnp.abs(out - ref)))
    assert max_err < 5e-2, f"max abs error vs reference: {max_err}"
    print("KERNEL_OK")
</pallas_src>

<mosaic_0001>
module attributes {stable_mosaic.version = 11 : i64} {
  func.func @conv_cross_attention_kernel(%arg0: i32, %arg1: memref<6x8x32xf32, #tpu.memory_space<vmem>>, %arg2: memref<6x16x8xf32, #tpu.memory_space<vmem>>, %arg3: memref<6x16x1xf32, #tpu.memory_space<vmem>>, %arg4: memref<2x6x16x1xf32, #tpu.memory_space<vmem>>, %arg5: memref<6x16x1xf32, #tpu.memory_space<vmem>>, %arg6: memref<6x16x1xf32, #tpu.memory_space<vmem>>, %arg7: memref<3x6x16x1xf32, #tpu.memory_space<vmem>>, %arg8: memref<6x16x1xf32, #tpu.memory_space<vmem>>, %arg9: memref<6x16x1xf32, #tpu.memory_space<vmem>>, %arg10: memref<6x16x1xf32, #tpu.memory_space<vmem>>, %arg11: memref<6x8x16xf32, #tpu.memory_space<vmem>>, %arg12: memref<6x8x1xf32, #tpu.memory_space<vmem>>, %arg13: memref<8x1xf32, #tpu.memory_space<vmem>>, %arg14: memref<8x1xf32, #tpu.memory_space<vmem>>, %arg15: memref<2x8x32xf32, #tpu.memory_space<vmem>>) attributes {dimension_semantics = [#tpu.dimension_semantics<arbitrary>], iteration_bounds = array<i64: 1>, scalar_prefetch = 0 : i64, scratch_operands = 0 : i64, tpu.core_type = #tpu.core_type<tc>, window_params = [{pipeline_mode = #tpu.pipeline_mode<synchronous>, transform_indices = @transform_0, window_bounds = array<i64: 6, 8, 32>}, {pipeline_mode = #tpu.pipeline_mode<synchronous>, transform_indices = @transform_1, window_bounds = array<i64: 6, 16, 8>}, {pipeline_mode = #tpu.pipeline_mode<synchronous>, transform_indices = @transform_2, window_bounds = array<i64: 6, 16, 1>}, {pipeline_mode = #tpu.pipeline_mode<synchronous>, transform_indices = @transform_3, window_bounds = array<i64: 2, 6, 16, 1>}, {pipeline_mode = #tpu.pipeline_mode<synchronous>, transform_indices = @transform_4, window_bounds = array<i64: 6, 16, 1>}, {pipeline_mode = #tpu.pipeline_mode<synchronous>, transform_indices = @transform_5, window_bounds = array<i64: 6, 16, 1>}, {pipeline_mode = #tpu.pipeline_mode<synchronous>, transform_indices = @transform_6, window_bounds = array<i64: 3, 6, 16, 1>}, {pipeline_mode = #tpu.pipeline_mode<synchronous>, transform_indices = @transform_7, window_bounds = array<i64: 6, 16, 1>}, {pipeline_mode = #tpu.pipeline_mode<synchronous>, transform_indices = @transform_8, window_bounds = array<i64: 6, 16, 1>}, {pipeline_mode = #tpu.pipeline_mode<synchronous>, transform_indices = @transform_9, window_bounds = array<i64: 6, 16, 1>}, {pipeline_mode = #tpu.pipeline_mode<synchronous>, transform_indices = @transform_10, window_bounds = array<i64: 6, 8, 16>}, {pipeline_mode = #tpu.pipeline_mode<synchronous>, transform_indices = @transform_11, window_bounds = array<i64: 6, 8, 1>}, {pipeline_mode = #tpu.pipeline_mode<synchronous>, transform_indices = @transform_12, window_bounds = array<i64: 8, 1>}, {pipeline_mode = #tpu.pipeline_mode<synchronous>, transform_indices = @transform_13, window_bounds = array<i64: 8, 1>}, {pipeline_mode = #tpu.pipeline_mode<synchronous>, transform_indices = @transform_14, window_bounds = array<i64: 2, 8, 32>}]} {
    %c0 = arith.constant 0 : index
    %c0_0 = arith.constant 0 : index
    %c0_1 = arith.constant 0 : index
    %0 = vector.load %arg1[%c0, %c0_0, %c0_1] : memref<6x8x32xf32, #tpu.memory_space<vmem>>, vector<6x8x32xf32>
    %c0_2 = arith.constant 0 : index
    %c0_3 = arith.constant 0 : index
    %c0_4 = arith.constant 0 : index
    %1 = vector.load %arg2[%c0_2, %c0_3, %c0_4] : memref<6x16x8xf32, #tpu.memory_space<vmem>>, vector<6x16x8xf32>
    "tpu.trace_start"() <{level = 10 : i32, message = "ghc,gcl->ghl"}> : () -> ()
    %cst = arith.constant dense<0.000000e+00> : vector<6x16x32xf32>
    %2 = tpu.matmul %1, %0, %cst {dimension_numbers = #tpu.dot_dimension_numbers<[2], [1], [1], [2], [0, 0, 0, 1, 1, 2], [0], [0]>} : vector<6x16x8xf32>, vector<6x8x32xf32>, vector<6x16x32xf32> -> vector<6x16x32xf32>
    "tpu.trace_stop"() : () -> ()
    %c0_5 = arith.constant 0 : index
    %c0_6 = arith.constant 0 : index
    %c0_7 = arith.constant 0 : index
    %3 = vector.load %arg3[%c0_5, %c0_6, %c0_7] : memref<6x16x1xf32, #tpu.memory_space<vmem>>, vector<6x16x1xf32>
    %4 = vector.broadcast %3 : vector<6x16x1xf32> to vector<6x16x32xf32>
    %5 = arith.addf %2, %4 : vector<6x16x32xf32>
    %cst_8 = arith.constant 0.000000e+00 : f32
    %6 = vector.broadcast %cst_8 : f32 to vector<6x16x32xf32>
    %7 = arith.cmpf ogt, %5, %6 : vector<6x16x32xf32>
    %c0_9 = arith.constant 0 : index
    %c0_10 = arith.constant 0 : index
    %c0_11 = arith.constant 0 : index
    %c0_12 = arith.constant 0 : index
    %8 = vector.load %arg4[%c0_9, %c0_10, %c0_11, %c0_12] : memref<2x6x16x1xf32, #tpu.memory_space<vmem>>, vector<1x6x16x1xf32>
    %9 = vector.shape_cast %8 : vector<1x6x16x1xf32> to vector<6x16x1xf32>
    %10 = vector.broadcast %9 : vector<6x16x1xf32> to vector<6x16x32xf32>
    %11 = arith.mulf %10, %5 : vector<6x16x32xf32>
    %12 = arith.select %7, %5, %11 : vector<6x16x32xi1>, vector<6x16x32xf32>
    %c0_13 = arith.constant 0 : index
    %c0_14 = arith.constant 0 : index
    %c0_15 = arith.constant 0 : index
    %13 = vector.load %arg5[%c0_13, %c0_14, %c0_15] : memref<6x16x1xf32, #tpu.memory_space<vmem>>, vector<6x16x1xf32>
    %c0_16 = arith.constant 0 : index
    %c0_17 = arith.constant 0 : index
    %c0_18 = arith.constant 0 : index
    %14 = vector.load %arg6[%c0_16, %c0_17, %c0_18] : memref<6x16x1xf32, #tpu.memory_space<vmem>>, vector<6x16x1xf32>
    %cst_19 = arith.constant dense<0.000000e+00> : vector<6x16xf32>
    %15 = vector.multi_reduction <add>, %12, %cst_19 [2] : vector<6x16x32xf32> to vector<6x16xf32>
    %16 = vector.shape_cast %15 : vector<6x16xf32> to vector<6x16x1xf32>
    %cst_20 = arith.constant dense<0.000000e+00> : vector<6x1xf32>
    %17 = vector.multi_reduction <add>, %16, %cst_20 [1] : vector<6x16x1xf32> to vector<6x1xf32>
    %18 = vector.shape_cast %17 : vector<6x1xf32> to vector<6x1x1xf32>
    %cst_21 = arith.constant 5.120000e+02 : f32
    %19 = vector.broadcast %cst_21 : f32 to vector<6x1x1xf32>
    %20 = arith.divf %18, %19 : vector<6x1x1xf32>
    %21 = vector.broadcast %20 : vector<6x1x1xf32> to vector<6x16x32xf32>
    %22 = arith.subf %12, %21 : vector<6x16x32xf32>
    %23 = arith.mulf %22, %22 : vector<6x16x32xf32>
    %cst_22 = arith.constant dense<0.000000e+00> : vector<6x16xf32>
    %24 = vector.multi_reduction <add>, %23, %cst_22 [2] : vector<6x16x32xf32> to vector<6x16xf32>
    %25 = vector.shape_cast %24 : vector<6x16xf32> to vector<6x16x1xf32>
    %cst_23 = arith.constant dense<0.000000e+00> : vector<6x1xf32>
    %26 = vector.multi_reduction <add>, %25, %cst_23 [1] : vector<6x16x1xf32> to vector<6x1xf32>
    %27 = vector.shape_cast %26 : vector<6x1xf32> to vector<6x1x1xf32>
    %cst_24 = arith.constant 5.120000e+02 : f32
    %28 = vector.broadcast %cst_24 : f32 to vector<6x1x1xf32>
    %29 = arith.divf %27, %28 : vector<6x1x1xf32>
    %cst_25 = arith.constant 9.99999993E-9 : f32
    %30 = vector.broadcast %cst_25 : f32 to vector<6x1x1xf32>
    %31 = arith.addf %29, %30 : vector<6x1x1xf32>
    %32 = math.rsqrt %31 : vector<6x1x1xf32>
    %33 = vector.broadcast %32 : vector<6x1x1xf32> to vector<6x16x32xf32>
    %34 = arith.mulf %22, %33 : vector<6x16x32xf32>
    %35 = vector.broadcast %13 : vector<6x16x1xf32> to vector<6x16x32xf32>
    %36 = arith.mulf %34, %35 : vector<6x16x32xf32>
    %37 = vector.broadcast %14 : vector<6x16x1xf32> to vector<6x16x32xf32>
    %38 = arith.addf %36, %37 : vector<6x16x32xf32>
    %cst_26 = arith.constant 0.000000e+00 : f32
    %39 = vector.broadcast %cst_26 : f32 to vector<6x16x1xf32>
    %cst_27 = arith.constant 0.000000e+00 : f32
    %40 = vector.broadcast %cst_27 : f32 to vector<6x16x1xf32>
    %41 = tpu.concatenate %39, %38, %40 in 2 : vector<6x16x1xf32>, vector<6x16x32xf32>, vector<6x16x1xf32> -> vector<6x16x34xf32>
    %cst_28 = arith.constant 0.000000e+00 : f32
    %42 = vector.broadcast %cst_28 : f32 to vector<6x16x32xf32>
    %c0_29 = arith.constant 0 : index
    %c0_30 = arith.constant 0 : index
    %c0_31 = arith.constant 0 : index
    %c0_32 = arith.constant 0 : index
    %43 = vector.load %arg7[%c0_29, %c0_30, %c0_31, %c0_32] : memref<3x6x16x1xf32, #tpu.memory_space<vmem>>, vector<1x6x16x1xf32>
    %44 = vector.shape_cast %43 : vector<1x6x16x1xf32> to vector<6x16x1xf32>
    %45 = vector.extract_strided_slice %41 {offsets = [0, 0, 0], sizes = [6, 16, 32], strides = [1, 1, 1]} : vector<6x16x34xf32> to vector<6x16x32xf32>
    %46 = vector.broadcast %44 : vector<6x16x1xf32> to vector<6x16x32xf32>
    %47 = arith.mulf %46, %45 : vector<6x16x32xf32>
    %48 = arith.addf %42, %47 : vector<6x16x32xf32>
    %c1 = arith.constant 1 : index
    %c0_33 = arith.constant 0 : index
    %c0_34 = arith.constant 0 : index
    %c0_35 = arith.constant 0 : index
    %49 = vector.load %arg7[%c1, %c0_33, %c0_34, %c0_35] : memref<3x6x16x1xf32, #tpu.memory_space<vmem>>, vector<1x6x16x1xf32>
    %50 = vector.shape_cast %49 : vector<1x6x16x1xf32> to vector<6x16x1xf32>
    %51 = vector.extract_strided_slice %41 {offsets = [0, 0, 1], sizes = [6, 16, 32], strides = [1, 1, 1]} : vector<6x16x34xf32> to vector<6x16x32xf32>
    %52 = vector.broadcast %50 : vector<6x16x1xf32> to vector<6x16x32xf32>
    %53 = arith.mulf %52, %51 : vector<6x16x32xf32>
    %54 = arith.addf %48, %53 : vector<6x16x32xf32>
    %c2 = arith.constant 2 : index
    %c0_36 = arith.constant 0 : index
    %c0_37 = arith.constant 0 : index
    %c0_38 = arith.constant 0 : index
    %55 = vector.load %arg7[%c2, %c0_36, %c0_37, %c0_38] : memref<3x6x16x1xf32, #tpu.memory_space<vmem>>, vector<1x6x16x1xf32>
    %56 = vector.shape_cast %55 : vector<1x6x16x1xf32> to vector<6x16x1xf32>
    %57 = vector.extract_strided_slice %41 {offsets = [0, 0, 2], sizes = [6, 16, 32], strides = [1, 1, 1]} : vector<6x16x34xf32> to vector<6x16x32xf32>
    %58 = vector.broadcast %56 : vector<6x16x1xf32> to vector<6x16x32xf32>
    %59 = arith.mulf %58, %57 : vector<6x16x32xf32>
    %60 = arith.addf %54, %59 : vector<6x16x32xf32>
    %c0_39 = arith.constant 0 : index
    %c0_40 = arith.constant 0 : index
    %c0_41 = arith.constant 0 : index
    %61 = vector.load %arg8[%c0_39, %c0_40, %c0_41] : memref<6x16x1xf32, #tpu.memory_space<vmem>>, vector<6x16x1xf32>
    %62 = vector.broadcast %61 : vector<6x16x1xf32> to vector<6x16x32xf32>
    %63 = arith.addf %60, %62 : vector<6x16x32xf32>
    %cst_42 = arith.constant 0.000000e+00 : f32
    %64 = vector.broadcast %cst_42 : f32 to vector<6x16x32xf32>
    %65 = arith.cmpf ogt, %63, %64 : vector<6x16x32xf32>
    %c1_43 = arith.constant 1 : index
    %c0_44 = arith.constant 0 : index
    %c0_45 = arith.constant 0 : index
    %c0_46 = arith.constant 0 : index
    %66 = vector.load %arg4[%c1_43, %c0_44, %c0_45, %c0_46] : memref<2x6x16x1xf32, #tpu.memory_space<vmem>>, vector<1x6x16x1xf32>
    %67 = vector.shape_cast %66 : vector<1x6x16x1xf32> to vector<6x16x1xf32>
    %68 = vector.broadcast %67 : vector<6x16x1xf32> to vector<6x16x32xf32>
    %69 = arith.mulf %68, %63 : vector<6x16x32xf32>
    %70 = arith.select %65, %63, %69 : vector<6x16x32xi1>, vector<6x16x32xf32>
    %c0_47 = arith.constant 0 : index
    %c0_48 = arith.constant 0 : index
    %c0_49 = arith.constant 0 : index
    %71 = vector.load %arg9[%c0_47, %c0_48, %c0_49] : memref<6x16x1xf32, #tpu.memory_space<vmem>>, vector<6x16x1xf32>
    %c0_50 = arith.constant 0 : index
    %c0_51 = arith.constant 0 : index
    %c0_52 = arith.constant 0 : index
    %72 = vector.load %arg10[%c0_50, %c0_51, %c0_52] : memref<6x16x1xf32, #tpu.memory_space<vmem>>, vector<6x16x1xf32>
    %cst_53 = arith.constant dense<0.000000e+00> : vector<6x16xf32>
    %73 = vector.multi_reduction <add>, %70, %cst_53 [2] : vector<6x16x32xf32> to vector<6x16xf32>
    %74 = vector.shape_cast %73 : vector<6x16xf32> to vector<6x16x1xf32>
    %cst_54 = arith.constant dense<0.000000e+00> : vector<6x1xf32>
    %75 = vector.multi_reduction <add>, %74, %cst_54 [1] : vector<6x16x1xf32> to vector<6x1xf32>
    %76 = vector.shape_cast %75 : vector<6x1xf32> to vector<6x1x1xf32>
    %cst_55 = arith.constant 5.120000e+02 : f32
    %77 = vector.broadcast %cst_55 : f32 to vector<6x1x1xf32>
    %78 = arith.divf %76, %77 : vector<6x1x1xf32>
    %79 = vector.broadcast %78 : vector<6x1x1xf32> to vector<6x16x32xf32>
    %80 = arith.subf %70, %79 : vector<6x16x32xf32>
    %81 = arith.mulf %80, %80 : vector<6x16x32xf32>
    %cst_56 = arith.constant dense<0.000000e+00> : vector<6x16xf32>
    %82 = vector.multi_reduction <add>, %81, %cst_56 [2] : vector<6x16x32xf32> to vector<6x16xf32>
    %83 = vector.shape_cast %82 : vector<6x16xf32> to vector<6x16x1xf32>
    %cst_57 = arith.constant dense<0.000000e+00> : vector<6x1xf32>
    %84 = vector.multi_reduction <add>, %83, %cst_57 [1] : vector<6x16x1xf32> to vector<6x1xf32>
    %85 = vector.shape_cast %84 : vector<6x1xf32> to vector<6x1x1xf32>
    %cst_58 = arith.constant 5.120000e+02 : f32
    %86 = vector.broadcast %cst_58 : f32 to vector<6x1x1xf32>
    %87 = arith.divf %85, %86 : vector<6x1x1xf32>
    %cst_59 = arith.constant 9.99999993E-9 : f32
    %88 = vector.broadcast %cst_59 : f32 to vector<6x1x1xf32>
    %89 = arith.addf %87, %88 : vector<6x1x1xf32>
    %90 = math.rsqrt %89 : vector<6x1x1xf32>
    %91 = vector.broadcast %90 : vector<6x1x1xf32> to vector<6x16x32xf32>
    %92 = arith.mulf %80, %91 : vector<6x16x32xf32>
    %93 = vector.broadcast %71 : vector<6x16x1xf32> to vector<6x16x32xf32>
    %94 = arith.mulf %92, %93 : vector<6x16x32xf32>
    %95 = vector.broadcast %72 : vector<6x16x1xf32> to vector<6x16x32xf32>
    %96 = arith.addf %94, %95 : vector<6x16x32xf32>
    %c0_60 = arith.constant 0 : index
    %c0_61 = arith.constant 0 : index
    %c0_62 = arith.constant 0 : index
    %97 = vector.load %arg11[%c0_60, %c0_61, %c0_62] : memref<6x8x16xf32, #tpu.memory_space<vmem>>, vector<6x8x16xf32>
    "tpu.trace_start"() <{level = 10 : i32, message = "gch,ghl->gcl"}> : () -> ()
    %cst_63 = arith.constant dense<0.000000e+00> : vector<6x8x32xf32>
    %98 = tpu.matmul %97, %96, %cst_63 {dimension_numbers = #tpu.dot_dimension_numbers<[2], [1], [1], [2], [0, 0, 0, 1, 1, 2], [0], [0]>} : vector<6x8x16xf32>, vector<6x16x32xf32>, vector<6x8x32xf32> -> vector<6x8x32xf32>
    "tpu.trace_stop"() : () -> ()
    %c0_64 = arith.constant 0 : index
    %c0_65 = arith.constant 0 : index
    %c0_66 = arith.constant 0 : index
    %99 = vector.load %arg12[%c0_64, %c0_65, %c0_66] : memref<6x8x1xf32, #tpu.memory_space<vmem>>, vector<6x8x1xf32>
    %100 = vector.broadcast %99 : vector<6x8x1xf32> to vector<6x8x32xf32>
    %101 = arith.addf %98, %100 : vector<6x8x32xf32>
    %102 = vector.extract_strided_slice %101 {offsets = [0, 0, 0], sizes = [1, 8, 32], strides = [1, 1, 1]} : vector<6x8x32xf32> to vector<1x8x32xf32>
    %103 = vector.shape_cast %102 : vector<1x8x32xf32> to vector<8x32xf32>
    %104 = vector.extract_strided_slice %101 {offsets = [2, 0, 0], sizes = [1, 8, 32], strides = [1, 1, 1]} : vector<6x8x32xf32> to vector<1x8x32xf32>
    %105 = vector.shape_cast %104 : vector<1x8x32xf32> to vector<8x32xf32>
    %106 = vector.extract_strided_slice %101 {offsets = [4, 0, 0], sizes = [1, 8, 32], strides = [1, 1, 1]} : vector<6x8x32xf32> to vector<1x8x32xf32>
    %107 = vector.shape_cast %106 : vector<1x8x32xf32> to vector<8x32xf32>
    %108 = vector.extract_strided_slice %0 {offsets = [4, 0, 0], sizes = [1, 8, 32], strides = [1, 1, 1]} : vector<6x8x32xf32> to vector<1x8x32xf32>
    %109 = vector.shape_cast %108 : vector<1x8x32xf32> to vector<8x32xf32>
    %110 = vector.extract_strided_slice %103 {offsets = [0, 0], sizes = [8, 16], strides = [1, 1]} : vector<8x32xf32> to vector<8x16xf32>
    %cst_67 = arith.constant 2.500000e-01 : f32
    %111 = vector.broadcast %cst_67 : f32 to vector<8x16xf32>
    %112 = arith.mulf %110, %111 : vector<8x16xf32>
    %113 = vector.extract_strided_slice %105 {offsets = [0, 0], sizes = [8, 16], strides = [1, 1]} : vector<8x32xf32> to vector<8x16xf32>
    %114 = vector.extract_strided_slice %107 {offsets = [0, 0], sizes = [8, 16], strides = [1, 1]} : vector<8x32xf32> to vector<8x16xf32>
    %cst_68 = arith.constant dense<0.000000e+00> : vector<8x8xf32>
    %115 = tpu.matmul %112, %113, %cst_68 {dimension_numbers = #tpu.dot_dimension_numbers<[1], [1], [0], [0], [0, 0, 1, 0], [], []>} : vector<8x16xf32>, vector<8x16xf32>, vector<8x8xf32> -> vector<8x8xf32>
    %cst_69 = arith.constant dense<0xFF800000> : vector<8xf32>
    %116 = vector.multi_reduction <maximumf>, %115, %cst_69 [1] : vector<8x8xf32> to vector<8xf32>
    %117 = vector.shape_cast %116 : vector<8xf32> to vector<8x1xf32>
    %118 = vector.broadcast %117 : vector<8x1xf32> to vector<8x8xf32>
    %119 = arith.subf %115, %118 : vector<8x8xf32>
    %120 = math.exp %119 : vector<8x8xf32>
    %cst_70 = arith.constant dense<0.000000e+00> : vector<8xf32>
    %121 = vector.multi_reduction <add>, %120, %cst_70 [1] : vector<8x8xf32> to vector<8xf32>
    %122 = vector.shape_cast %121 : vector<8xf32> to vector<8x1xf32>
    %123 = tpu.reciprocal %122 {approx = true} : vector<8x1xf32> -> vector<8x1xf32>
    %124 = vector.broadcast %123 : vector<8x1xf32> to vector<8x8xf32>
    %125 = arith.mulf %120, %124 : vector<8x8xf32>
    %cst_71 = arith.constant dense<0.000000e+00> : vector<8x16xf32>
    %126 = tpu.matmul %125, %114, %cst_71 {dimension_numbers = #tpu.dot_dimension_numbers<[1], [0], [0], [1], [0, 0, 1, 1], [], []>} : vector<8x8xf32>, vector<8x16xf32>, vector<8x16xf32> -> vector<8x16xf32>
    %127 = vector.extract_strided_slice %103 {offsets = [0, 16], sizes = [8, 16], strides = [1, 1]} : vector<8x32xf32> to vector<8x16xf32>
    %cst_72 = arith.constant 2.500000e-01 : f32
    %128 = vector.broadcast %cst_72 : f32 to vector<8x16xf32>
    %129 = arith.mulf %127, %128 : vector<8x16xf32>
    %130 = vector.extract_strided_slice %105 {offsets = [0, 16], sizes = [8, 16], strides = [1, 1]} : vector<8x32xf32> to vector<8x16xf32>
    %131 = vector.extract_strided_slice %107 {offsets = [0, 16], sizes = [8, 16], strides = [1, 1]} : vector<8x32xf32> to vector<8x16xf32>
    %cst_73 = arith.constant dense<0.000000e+00> : vector<8x8xf32>
    %132 = tpu.matmul %129, %130, %cst_73 {dimension_numbers = #tpu.dot_dimension_numbers<[1], [1], [0], [0], [0, 0, 1, 0], [], []>} : vector<8x16xf32>, vector<8x16xf32>, vector<8x8xf32> -> vector<8x8xf32>
    %cst_74 = arith.constant dense<0xFF800000> : vector<8xf32>
    %133 = vector.multi_reduction <maximumf>, %132, %cst_74 [1] : vector<8x8xf32> to vector<8xf32>
    %134 = vector.shape_cast %133 : vector<8xf32> to vector<8x1xf32>
    %135 = vector.broadcast %134 : vector<8x1xf32> to vector<8x8xf32>
    %136 = arith.subf %132, %135 : vector<8x8xf32>
    %137 = math.exp %136 : vector<8x8xf32>
    %cst_75 = arith.constant dense<0.000000e+00> : vector<8xf32>
    %138 = vector.multi_reduction <add>, %137, %cst_75 [1] : vector<8x8xf32> to vector<8xf32>
    %139 = vector.shape_cast %138 : vector<8xf32> to vector<8x1xf32>
    %140 = tpu.reciprocal %139 {approx = true} : vector<8x1xf32> -> vector<8x1xf32>
    %141 = vector.broadcast %140 : vector<8x1xf32> to vector<8x8xf32>
    %142 = arith.mulf %137, %141 : vector<8x8xf32>
    %cst_76 = arith.constant dense<0.000000e+00> : vector<8x16xf32>
    %143 = tpu.matmul %142, %131, %cst_76 {dimension_numbers = #tpu.dot_dimension_numbers<[1], [0], [0], [1], [0, 0, 1, 1], [], []>} : vector<8x8xf32>, vector<8x16xf32>, vector<8x16xf32> -> vector<8x16xf32>
    %144 = tpu.concatenate %126, %143 in 1 : vector<8x16xf32>, vector<8x16xf32> -> vector<8x32xf32>
    %145 = arith.addf %144, %109 : vector<8x32xf32>
    %c0_77 = arith.constant 0 : index
    %c0_78 = arith.constant 0 : index
    %146 = vector.load %arg13[%c0_77, %c0_78] : memref<8x1xf32, #tpu.memory_space<vmem>>, vector<8x1xf32>
    %c0_79 = arith.constant 0 : index
    %c0_80 = arith.constant 0 : index
    %147 = vector.load %arg14[%c0_79, %c0_80] : memref<8x1xf32, #tpu.memory_space<vmem>>, vector<8x1xf32>
    %148 = vector.shape_cast %145 : vector<8x32xf32> to vector<1x8x32xf32>
    %cst_81 = arith.constant dense<0.000000e+00> : vector<1xf32>
    %149 = vector.multi_reduction <add>, %148, %cst_81 [1, 2] : vector<1x8x32xf32> to vector<1xf32>
    %150 = vector.shape_cast %149 : vector<1xf32> to vector<1x1x1xf32>
    %151 = vector.extract %150[0, 0, 0] : f32 from vector<1x1x1xf32>
    %152 = vector.broadcast %151 : f32 to vector<1x1xf32>
    %cst_82 = arith.constant 2.560000e+02 : f32
    %153 = vector.broadcast %cst_82 : f32 to vector<1x1xf32>
    %154 = arith.divf %152, %153 : vector<1x1xf32>
    %155 = vector.broadcast %154 : vector<1x1xf32> to vector<8x32xf32>
    %156 = arith.subf %145, %155 : vector<8x32xf32>
    %157 = arith.mulf %156, %156 : vector<8x32xf32>
    %158 = vector.shape_cast %157 : vector<8x32xf32> to vector<1x8x32xf32>
    %cst_83 = arith.constant dense<0.000000e+00> : vector<1xf32>
    %159 = vector.multi_reduction <add>, %158, %cst_83 [1, 2] : vector<1x8x32xf32> to vector<1xf32>
    %160 = vector.shape_cast %159 : vector<1xf32> to vector<1x1x1xf32>
    %161 = vector.extract %160[0, 0, 0] : f32 from vector<1x1x1xf32>
    %162 = vector.broadcast %161 : f32 to vector<1x1xf32>
    %cst_84 = arith.constant 2.560000e+02 : f32
    %163 = vector.broadcast %cst_84 : f32 to vector<1x1xf32>
    %164 = arith.divf %162, %163 : vector<1x1xf32>
    %cst_85 = arith.constant 9.99999993E-9 : f32
    %165 = vector.broadcast %cst_85 : f32 to vector<1x1xf32>
    %166 = arith.addf %164, %165 : vector<1x1xf32>
    %167 = math.rsqrt %166 : vector<1x1xf32>
    %168 = vector.broadcast %167 : vector<1x1xf32> to vector<8x32xf32>
    %169 = arith.mulf %156, %168 : vector<8x32xf32>
    %170 = vector.broadcast %146 : vector<8x1xf32> to vector<8x32xf32>
    %171 = arith.mulf %169, %170 : vector<8x32xf32>
    %172 = vector.broadcast %147 : vector<8x1xf32> to vector<8x32xf32>
    %173 = arith.addf %171, %172 : vector<8x32xf32>
    %c0_86 = arith.constant 0 : index
    %c0_87 = arith.constant 0 : index
    %c0_88 = arith.constant 0 : index
    %174 = vector.load %arg15[%c0_86, %c0_87, %c0_88] : memref<2x8x32xf32, #tpu.memory_space<vmem>>, vector<1x8x32xf32>
    %175 = vector.shape_cast %174 : vector<1x8x32xf32> to vector<8x32xf32>
    %176 = vector.shape_cast %173 : vector<8x32xf32> to vector<1x8x32xf32>
    tpu.vector_store %arg15[%c0_86, %c0_87, %c0_88], %176 {strides = array<i32>} : memref<2x8x32xf32, #tpu.memory_space<vmem>>, vector<1x8x32xf32>,
    %177 = vector.extract_strided_slice %101 {offsets = [1, 0, 0], sizes = [1, 8, 32], strides = [1, 1, 1]} : vector<6x8x32xf32> to vector<1x8x32xf32>
    %178 = vector.shape_cast %177 : vector<1x8x32xf32> to vector<8x32xf32>
    %179 = vector.extract_strided_slice %101 {offsets = [3, 0, 0], sizes = [1, 8, 32], strides = [1, 1, 1]} : vector<6x8x32xf32> to vector<1x8x32xf32>
    %180 = vector.shape_cast %179 : vector<1x8x32xf32> to vector<8x32xf32>
    %181 = vector.extract_strided_slice %101 {offsets = [5, 0, 0], sizes = [1, 8, 32], strides = [1, 1, 1]} : vector<6x8x32xf32> to vector<1x8x32xf32>
    %182 = vector.shape_cast %181 : vector<1x8x32xf32> to vector<8x32xf32>
    %183 = vector.extract_strided_slice %0 {offsets = [5, 0, 0], sizes = [1, 8, 32], strides = [1, 1, 1]} : vector<6x8x32xf32> to vector<1x8x32xf32>
    %184 = vector.shape_cast %183 : vector<1x8x32xf32> to vector<8x32xf32>
    %185 = vector.extract_strided_slice %178 {offsets = [0, 0], sizes = [8, 16], strides = [1, 1]} : vector<8x32xf32> to vector<8x16xf32>
    %cst_89 = arith.constant 2.500000e-01 : f32
    %186 = vector.broadcast %cst_89 : f32 to vector<8x16xf32>
    %187 = arith.mulf %185, %186 : vector<8x16xf32>
    %188 = vector.extract_strided_slice %180 {offsets = [0, 0], sizes = [8, 16], strides = [1, 1]} : vector<8x32xf32> to vector<8x16xf32>
    %189 = vector.extract_strided_slice %182 {offsets = [0, 0], sizes = [8, 16], strides = [1, 1]} : vector<8x32xf32> to vector<8x16xf32>
    %cst_90 = arith.constant dense<0.000000e+00> : vector<8x8xf32>
    %190 = tpu.matmul %187, %188, %cst_90 {dimension_numbers = #tpu.dot_dimension_numbers<[1], [1], [0], [0], [0, 0, 1, 0], [], []>} : vector<8x16xf32>, vector<8x16xf32>, vector<8x8xf32> -> vector<8x8xf32>
    %cst_91 = arith.constant dense<0xFF800000> : vector<8xf32>
    %191 = vector.multi_reduction <maximumf>, %190, %cst_91 [1] : vector<8x8xf32> to vector<8xf32>
    %192 = vector.shape_cast %191 : vector<8xf32> to vector<8x1xf32>
    %193 = vector.broadcast %192 : vector<8x1xf32> to vector<8x8xf32>
    %194 = arith.subf %190, %193 : vector<8x8xf32>
    %195 = math.exp %194 : vector<8x8xf32>
    %cst_92 = arith.constant dense<0.000000e+00> : vector<8xf32>
    %196 = vector.multi_reduction <add>, %195, %cst_92 [1] : vector<8x8xf32> to vector<8xf32>
    %197 = vector.shape_cast %196 : vector<8xf32> to vector<8x1xf32>
    %198 = tpu.reciprocal %197 {approx = true} : vector<8x1xf32> -> vector<8x1xf32>
    %199 = vector.broadcast %198 : vector<8x1xf32> to vector<8x8xf32>
    %200 = arith.mulf %195, %199 : vector<8x8xf32>
    %cst_93 = arith.constant dense<0.000000e+00> : vector<8x16xf32>
    %201 = tpu.matmul %200, %189, %cst_93 {dimension_numbers = #tpu.dot_dimension_numbers<[1], [0], [0], [1], [0, 0, 1, 1], [], []>} : vector<8x8xf32>, vector<8x16xf32>, vector<8x16xf32> -> vector<8x16xf32>
    %202 = vector.extract_strided_slice %178 {offsets = [0, 16], sizes = [8, 16], strides = [1, 1]} : vector<8x32xf32> to vector<8x16xf32>
    %cst_94 = arith.constant 2.500000e-01 : f32
    %203 = vector.broadcast %cst_94 : f32 to vector<8x16xf32>
    %204 = arith.mulf %202, %203 : vector<8x16xf32>
    %205 = vector.extract_strided_slice %180 {offsets = [0, 16], sizes = [8, 16], strides = [1, 1]} : vector<8x32xf32> to vector<8x16xf32>
    %206 = vector.extract_strided_slice %182 {offsets = [0, 16], sizes = [8, 16], strides = [1, 1]} : vector<8x32xf32> to vector<8x16xf32>
    %cst_95 = arith.constant dense<0.000000e+00> : vector<8x8xf32>
    %207 = tpu.matmul %204, %205, %cst_95 {dimension_numbers = #tpu.dot_dimension_numbers<[1], [1], [0], [0], [0, 0, 1, 0], [], []>} : vector<8x16xf32>, vector<8x16xf32>, vector<8x8xf32> -> vector<8x8xf32>
    %cst_96 = arith.constant dense<0xFF800000> : vector<8xf32>
    %208 = vector.multi_reduction <maximumf>, %207, %cst_96 [1] : vector<8x8xf32> to vector<8xf32>
    %209 = vector.shape_cast %208 : vector<8xf32> to vector<8x1xf32>
    %210 = vector.broadcast %209 : vector<8x1xf32> to vector<8x8xf32>
    %211 = arith.subf %207, %210 : vector<8x8xf32>
    %212 = math.exp %211 : vector<8x8xf32>
    %cst_97 = arith.constant dense<0.000000e+00> : vector<8xf32>
    %213 = vector.multi_reduction <add>, %212, %cst_97 [1] : vector<8x8xf32> to vector<8xf32>
    %214 = vector.shape_cast %213 : vector<8xf32> to vector<8x1xf32>
    %215 = tpu.reciprocal %214 {approx = true} : vector<8x1xf32> -> vector<8x1xf32>
    %216 = vector.broadcast %215 : vector<8x1xf32> to vector<8x8xf32>
    %217 = arith.mulf %212, %216 : vector<8x8xf32>
    %cst_98 = arith.constant dense<0.000000e+00> : vector<8x16xf32>
    %218 = tpu.matmul %217, %206, %cst_98 {dimension_numbers = #tpu.dot_dimension_numbers<[1], [0], [0], [1], [0, 0, 1, 1], [], []>} : vector<8x8xf32>, vector<8x16xf32>, vector<8x16xf32> -> vector<8x16xf32>
    %219 = tpu.concatenate %201, %218 in 1 : vector<8x16xf32>, vector<8x16xf32> -> vector<8x32xf32>
    %220 = arith.addf %219, %184 : vector<8x32xf32>
    %c0_99 = arith.constant 0 : index
    %c0_100 = arith.constant 0 : index
    %221 = vector.load %arg13[%c0_99, %c0_100] : memref<8x1xf32, #tpu.memory_space<vmem>>, vector<8x1xf32>
    %c0_101 = arith.constant 0 : index
    %c0_102 = arith.constant 0 : index
    %222 = vector.load %arg14[%c0_101, %c0_102] : memref<8x1xf32, #tpu.memory_space<vmem>>, vector<8x1xf32>
    %223 = vector.shape_cast %220 : vector<8x32xf32> to vector<1x8x32xf32>
    %cst_103 = arith.constant dense<0.000000e+00> : vector<1xf32>
    %224 = vector.multi_reduction <add>, %223, %cst_103 [1, 2] : vector<1x8x32xf32> to vector<1xf32>
    %225 = vector.shape_cast %224 : vector<1xf32> to vector<1x1x1xf32>
    %226 = vector.extract %225[0, 0, 0] : f32 from vector<1x1x1xf32>
    %227 = vector.broadcast %226 : f32 to vector<1x1xf32>
    %cst_104 = arith.constant 2.560000e+02 : f32
    %228 = vector.broadcast %cst_104 : f32 to vector<1x1xf32>
    %229 = arith.divf %227, %228 : vector<1x1xf32>
    %230 = vector.broadcast %229 : vector<1x1xf32> to vector<8x32xf32>
    %231 = arith.subf %220, %230 : vector<8x32xf32>
    %232 = arith.mulf %231, %231 : vector<8x32xf32>
    %233 = vector.shape_cast %232 : vector<8x32xf32> to vector<1x8x32xf32>
    %cst_105 = arith.constant dense<0.000000e+00> : vector<1xf32>
    %234 = vector.multi_reduction <add>, %233, %cst_105 [1, 2] : vector<1x8x32xf32> to vector<1xf32>
    %235 = vector.shape_cast %234 : vector<1xf32> to vector<1x1x1xf32>
    %236 = vector.extract %235[0, 0, 0] : f32 from vector<1x1x1xf32>
    %237 = vector.broadcast %236 : f32 to vector<1x1xf32>
    %cst_106 = arith.constant 2.560000e+02 : f32
    %238 = vector.broadcast %cst_106 : f32 to vector<1x1xf32>
    %239 = arith.divf %237, %238 : vector<1x1xf32>
    %cst_107 = arith.constant 9.99999993E-9 : f32
    %240 = vector.broadcast %cst_107 : f32 to vector<1x1xf32>
    %241 = arith.addf %239, %240 : vector<1x1xf32>
    %242 = math.rsqrt %241 : vector<1x1xf32>
    %243 = vector.broadcast %242 : vector<1x1xf32> to vector<8x32xf32>
    %244 = arith.mulf %231, %243 : vector<8x32xf32>
    %245 = vector.broadcast %221 : vector<8x1xf32> to vector<8x32xf32>
    %246 = arith.mulf %244, %245 : vector<8x32xf32>
    %247 = vector.broadcast %222 : vector<8x1xf32> to vector<8x32xf32>
    %248 = arith.addf %246, %247 : vector<8x32xf32>
    %c1_108 = arith.constant 1 : index
    %c0_109 = arith.constant 0 : index
    %c0_110 = arith.constant 0 : index
    %249 = vector.load %arg15[%c1_108, %c0_109, %c0_110] : memref<2x8x32xf32, #tpu.memory_space<vmem>>, vector<1x8x32xf32>
    %250 = vector.shape_cast %249 : vector<1x8x32xf32> to vector<8x32xf32>
    %251 = vector.shape_cast %248 : vector<8x32xf32> to vector<1x8x32xf32>
    tpu.vector_store %arg15[%c1_108, %c0_109, %c0_110], %251 {strides = array<i32>} : memref<2x8x32xf32, #tpu.memory_space<vmem>>, vector<1x8x32xf32>,
    return
  }
  func.func @transform_0(%arg0: i32) -> (i32, i32, i32) {
    %c0_i32 = arith.constant 0 : i32
    %c0_i32_0 = arith.constant 0 : i32
    %c0_i32_1 = arith.constant 0 : i32
    %c0_i32_2 = arith.constant 0 : i32
    return %c0_i32, %c0_i32_0, %c0_i32_1 : i32, i32, i32
  }
  func.func @transform_1(%arg0: i32) -> (i32, i32, i32) {
    %c0_i32 = arith.constant 0 : i32
    %c0_i32_0 = arith.constant 0 : i32
    %c0_i32_1 = arith.constant 0 : i32
    %c0_i32_2 = arith.constant 0 : i32
    return %c0_i32, %c0_i32_0, %c0_i32_1 : i32, i32, i32
  }
  func.func @transform_2(%arg0: i32) -> (i32, i32, i32) {
    %c0_i32 = arith.constant 0 : i32
    %c0_i32_0 = arith.constant 0 : i32
    %c0_i32_1 = arith.constant 0 : i32
    %c0_i32_2 = arith.constant 0 : i32
    return %c0_i32, %c0_i32_0, %c0_i32_1 : i32, i32, i32
  }
  func.func @transform_3(%arg0: i32) -> (i32, i32, i32, i32) {
    %c0_i32 = arith.constant 0 : i32
    %c0_i32_0 = arith.constant 0 : i32
    %c0_i32_1 = arith.constant 0 : i32
    %c0_i32_2 = arith.constant 0 : i32
    %c0_i32_3 = arith.constant 0 : i32
    return %c0_i32, %c0_i32_0, %c0_i32_1, %c0_i32_2 : i32, i32, i32, i32
  }
  func.func @transform_4(%arg0: i32) -> (i32, i32, i32) {
    %c0_i32 = arith.constant 0 : i32
    %c0_i32_0 = arith.constant 0 : i32
    %c0_i32_1 = arith.constant 0 : i32
    %c0_i32_2 = arith.constant 0 : i32
    return %c0_i32, %c0_i32_0, %c0_i32_1 : i32, i32, i32
  }
  func.func @transform_5(%arg0: i32) -> (i32, i32, i32) {
    %c0_i32 = arith.constant 0 : i32
    %c0_i32_0 = arith.constant 0 : i32
    %c0_i32_1 = arith.constant 0 : i32
    %c0_i32_2 = arith.constant 0 : i32
    return %c0_i32, %c0_i32_0, %c0_i32_1 : i32, i32, i32
  }
  func.func @transform_6(%arg0: i32) -> (i32, i32, i32, i32) {
    %c0_i32 = arith.constant 0 : i32
    %c0_i32_0 = arith.constant 0 : i32
    %c0_i32_1 = arith.constant 0 : i32
    %c0_i32_2 = arith.constant 0 : i32
    %c0_i32_3 = arith.constant 0 : i32
    return %c0_i32, %c0_i32_0, %c0_i32_1, %c0_i32_2 : i32, i32, i32, i32
  }
  func.func @transform_7(%arg0: i32) -> (i32, i32, i32) {
    %c0_i32 = arith.constant 0 : i32
    %c0_i32_0 = arith.constant 0 : i32
    %c0_i32_1 = arith.constant 0 : i32
    %c0_i32_2 = arith.constant 0 : i32
    return %c0_i32, %c0_i32_0, %c0_i32_1 : i32, i32, i32
  }
  func.func @transform_8(%arg0: i32) -> (i32, i32, i32) {
    %c0_i32 = arith.constant 0 : i32
    %c0_i32_0 = arith.constant 0 : i32
    %c0_i32_1 = arith.constant 0 : i32
    %c0_i32_2 = arith.constant 0 : i32
    return %c0_i32, %c0_i32_0, %c0_i32_1 : i32, i32, i32
  }
  func.func @transform_9(%arg0: i32) -> (i32, i32, i32) {
    %c0_i32 = arith.constant 0 : i32
    %c0_i32_0 = arith.constant 0 : i32
    %c0_i32_1 = arith.constant 0 : i32
    %c0_i32_2 = arith.constant 0 : i32
    return %c0_i32, %c0_i32_0, %c0_i32_1 : i32, i32, i32
  }
  func.func @transform_10(%arg0: i32) -> (i32, i32, i32) {
    %c0_i32 = arith.constant 0 : i32
    %c0_i32_0 = arith.constant 0 : i32
    %c0_i32_1 = arith.constant 0 : i32
    %c0_i32_2 = arith.constant 0 : i32
    return %c0_i32, %c0_i32_0, %c0_i32_1 : i32, i32, i32
  }
  func.func @transform_11(%arg0: i32) -> (i32, i32, i32) {
    %c0_i32 = arith.constant 0 : i32
    %c0_i32_0 = arith.constant 0 : i32
    %c0_i32_1 = arith.constant 0 : i32
    %c0_i32_2 = arith.constant 0 : i32
    return %c0_i32, %c0_i32_0, %c0_i32_1 : i32, i32, i32
  }
  func.func @transform_12(%arg0: i32) -> (i32, i32) {
    %c0_i32 = arith.constant 0 : i32
    %c0_i32_0 = arith.constant 0 : i32
    %c0_i32_1 = arith.constant 0 : i32
    return %c0_i32, %c0_i32_0 : i32, i32
  }
  func.func @transform_13(%arg0: i32) -> (i32, i32) {
    %c0_i32 = arith.constant 0 : i32
    %c0_i32_0 = arith.constant 0 : i32
    %c0_i32_1 = arith.constant 0 : i32
    return %c0_i32, %c0_i32_0 : i32, i32
  }
  func.func @transform_14(%arg0: i32) -> (i32, i32, i32) {
    %c0_i32 = arith.constant 0 : i32
    %c0_i32_0 = arith.constant 0 : i32
    %c0_i32_1 = arith.constant 0 : i32
    %c0_i32_2 = arith.constant 0 : i32
    return %c0_i32, %c0_i32_0, %c0_i32_1 : i32, i32, i32
  }
}

</mosaic_0001>

<llo_original>
// kernel: tpu_custom_call.1
$region0: #{tpu_custom_call.1}
  #allocation0 [shape = 'u32[]', space=smem, size = 0x4, offset = 0x4, fixed_abs, tag = 'smem constant byte address 0x4 - core index']
  #allocation1 [shape = 'u32[72,128]{1,0:T(1,128)}', space=vmem, size = 0x9000, scoped, tag = 'internal scratch']
  %s0 = inlined_call_operand.vmem [shape: f32[6,8,32], index: 0, kind: input, shape index: {}]
  %s1 = inlined_call_operand.vmem [shape: f32[6,16,8], index: 1, kind: input, shape index: {}]
  %s2 = inlined_call_operand.vmem [shape: f32[6,16,1], index: 2, kind: input, shape index: {}]
  %s3 = inlined_call_operand.vmem [shape: f32[2,6,16,1], index: 3, kind: input, shape index: {}]
  %s4 = inlined_call_operand.vmem [shape: f32[6,16,1], index: 4, kind: input, shape index: {}]
  %s5 = inlined_call_operand.vmem [shape: f32[6,16,1], index: 5, kind: input, shape index: {}]
  %s6 = inlined_call_operand.vmem [shape: f32[3,6,16,1], index: 6, kind: input, shape index: {}]
  %s7 = inlined_call_operand.vmem [shape: f32[6,16,1], index: 7, kind: input, shape index: {}]
  %s8 = inlined_call_operand.vmem [shape: f32[6,16,1], index: 8, kind: input, shape index: {}]
  %s9 = inlined_call_operand.vmem [shape: f32[6,16,1], index: 9, kind: input, shape index: {}]
  %s10 = inlined_call_operand.vmem [shape: f32[6,8,16], index: 10, kind: input, shape index: {}]
  %s11 = inlined_call_operand.vmem [shape: f32[6,8,1], index: 11, kind: input, shape index: {}]
  %s12 = inlined_call_operand.vmem [shape: f32[8,1], index: 12, kind: input, shape index: {}]
  %s13 = inlined_call_operand.vmem [shape: f32[8,1], index: 13, kind: input, shape index: {}]
  %s14 = inlined_call_operand.hbm [shape: f32[2,8,32], index: 14, kind: output, shape index: {}]
  %s15 = sld [smem:[#allocation0]]
  $region66: #{tpu_custom_call.1} parent=0
    _
  %s17 = ssub.s32 1, %s15
  %s18 = scalar_select 0, %s17, %s15
  $region1: #{tpu_custom_call.1} parent=0
    #allocation2 [shape = 'u8[8192]{0}', space=vmem, size = 0x2000, scoped, tag = 'output window, operand 0, single buffered']
    #allocation3 [shape = 's32[1]{0}', space=sflag, size = 0x4, scoped, tag = 'scoped memory for tpu_custom_call.1']
    %19 = vsyncpa [#allocation3], 0
    // Predicated region
    $region2: #{tpu_custom_call.1} parent=1 // pred_check
      _
    $region3: #{tpu_custom_call.1} parent=1 // pred_check_branch
      %21 = sbr.rel (0) target = $region5
    $region4: #{tpu_custom_call.1} parent=1 // pred_region
      _
    $region5: #{tpu_custom_call.1} parent=1 // pred_fallthru
      _
    // Predicated region
    $region6: #{tpu_custom_call.1} parent=1 // pred_check
      _
    $region7: #{tpu_custom_call.1} parent=1 // pred_check_branch
      %23 = sbr.rel (0) target = $region9
    $region8: #{tpu_custom_call.1} parent=1 // pred_region
      _
    $region9: #{tpu_custom_call.1} parent=1 // pred_fallthru
      _
    // Predicated region
    $region10: #{tpu_custom_call.1} parent=1 // pred_check
      _
    $region11: #{tpu_custom_call.1} parent=1 // pred_check_branch
      %25 = sbr.rel (0) target = $region13
    $region12: #{tpu_custom_call.1} parent=1 // pred_region
      _
    $region13: #{tpu_custom_call.1} parent=1 // pred_fallthru
      _
    // Predicated region
    $region14: #{tpu_custom_call.1} parent=1 // pred_check
      _
    $region15: #{tpu_custom_call.1} parent=1 // pred_check_branch
      %27 = sbr.rel (0) target = $region17
    $region16: #{tpu_custom_call.1} parent=1 // pred_region
      _
    $region17: #{tpu_custom_call.1} parent=1 // pred_fallthru
      _
    // Predicated region
    $region18: #{tpu_custom_call.1} parent=1 // pred_check
      _
    $region19: #{tpu_custom_call.1} parent=1 // pred_check_branch
      %29 = sbr.rel (0) target = $region21
    $region20: #{tpu_custom_call.1} parent=1 // pred_region
      _
    $region21: #{tpu_custom_call.1} parent=1 // pred_fallthru
      _
    // Predicated region
    $region22: #{tpu_custom_call.1} parent=1 // pred_check
      _
    $region23: #{tpu_custom_call.1} parent=1 // pred_check_branch
      %31 = sbr.rel (0) target = $region25
    $region24: #{tpu_custom_call.1} parent=1 // pred_region
      _
    $region25: #{tpu_custom_call.1} parent=1 // pred_fallthru
      _
    // Predicated region
    $region26: #{tpu_custom_call.1} parent=1 // pred_check
      _
    $region27: #{tpu_custom_call.1} parent=1 // pred_check_branch
      %33 = sbr.rel (0) target = $region29
    $region28: #{tpu_custom_call.1} parent=1 // pred_region
      _
    $region29: #{tpu_custom_call.1} parent=1 // pred_fallthru
      _
    // Predicated region
    $region30: #{tpu_custom_call.1} parent=1 // pred_check
      _
    $region31: #{tpu_custom_call.1} parent=1 // pred_check_branch
      %35 = sbr.rel (0) target = $region33
    $region32: #{tpu_custom_call.1} parent=1 // pred_region
      _
    $region33: #{tpu_custom_call.1} parent=1 // pred_fallthru
      _
    // Predicated region
    $region34: #{tpu_custom_call.1} parent=1 // pred_check
      _
    $region35: #{tpu_custom_call.1} parent=1 // pred_check_branch
      %37 = sbr.rel (0) target = $region37
    $region36: #{tpu_custom_call.1} parent=1 // pred_region
      _
    $region37: #{tpu_custom_call.1} parent=1 // pred_fallthru
      _
    // Predicated region
    $region38: #{tpu_custom_call.1} parent=1 // pred_check
      _
    $region39: #{tpu_custom_call.1} parent=1 // pred_check_branch
      %39 = sbr.rel (0) target = $region41
    $region40: #{tpu_custom_call.1} parent=1 // pred_region
      _
    $region41: #{tpu_custom_call.1} parent=1 // pred_fallthru
      _
    // Predicated region
    $region42: #{tpu_custom_call.1} parent=1 // pred_check
      _
    $region43: #{tpu_custom_call.1} parent=1 // pred_check_branch
      %41 = sbr.rel (0) target = $region45
    $region44: #{tpu_custom_call.1} parent=1 // pred_region
      _
    $region45: #{tpu_custom_call.1} parent=1 // pred_fallthru
      _
    // Predicated region
    $region46: #{tpu_custom_call.1} parent=1 // pred_check
      _
    $region47: #{tpu_custom_call.1} parent=1 // pred_check_branch
      %43 = sbr.rel (0) target = $region49
    $region48: #{tpu_custom_call.1} parent=1 // pred_region
      _
    $region49: #{tpu_custom_call.1} parent=1 // pred_fallthru
      _
    // Predicated region
    $region50: #{tpu_custom_call.1} parent=1 // pred_check
      _
    $region51: #{tpu_custom_call.1} parent=1 // pred_check_branch
      %45 = sbr.rel (0) target = $region53
    $region52: #{tpu_custom_call.1} parent=1 // pred_region
      _
    $region53: #{tpu_custom_call.1} parent=1 // pred_fallthru
      _
    // Predicated region
    $region54: #{tpu_custom_call.1} parent=1 // pred_check
      _
    $region55: #{tpu_custom_call.1} parent=1 // pred_check_branch
      %47 = sbr.rel (0) target = $region57
    $region56: #{tpu_custom_call.1} parent=1 // pred_region
      _
    $region57: #{tpu_custom_call.1} parent=1 // pred_fallthru
      _
    %v48 = vld [vmem:[%s0] sm:$0xff]
    %v49 = vld [vmem:[%s0 + $0x8] sm:$0xff]
    %v50 = vld [vmem:[%s0 + $0x10] sm:$0xff]
    %v51 = vld [vmem:[%s0 + $0x18] sm:$0xff]
    %v52 = vld [vmem:[%s0 + $0x20] sm:$0xff]
    %v53 = vld [vmem:[%s0 + $0x28] sm:$0xff]
    %v54 = vld [vmem:[%s1] sm:$0xff]
    %v55 = vld [vmem:[%s1 + $0x8] sm:$0xff]
    %v56 = vld [vmem:[%s1 + $0x10] sm:$0xff]
    %v57 = vld [vmem:[%s1 + $0x18] sm:$0xff]
    %v58 = vld [vmem:[%s1 + $0x20] sm:$0xff]
    %v59 = vld [vmem:[%s1 + $0x28] sm:$0xff]
    %v60 = vld [vmem:[%s1 + $0x30] sm:$0xff]
    %v61 = vld [vmem:[%s1 + $0x38] sm:$0xff]
    %v62 = vld [vmem:[%s1 + $0x40] sm:$0xff]
    %v63 = vld [vmem:[%s1 + $0x48] sm:$0xff]
    %v64 = vld [vmem:[%s1 + $0x50] sm:$0xff]
    %v65 = vld [vmem:[%s1 + $0x58] sm:$0xff]
    %v66 = vld [vmem:[%s2] sm:$0xff]
    %v67 = vld [vmem:[%s2 + $0x8] sm:$0xff]
    %v68 = vld [vmem:[%s2 + $0x10] sm:$0xff]
    %v69 = vld [vmem:[%s2 + $0x18] sm:$0xff]
    %v70 = vld [vmem:[%s2 + $0x20] sm:$0xff]
    %v71 = vld [vmem:[%s2 + $0x28] sm:$0xff]
    %v72 = vld [vmem:[%s2 + $0x30] sm:$0xff]
    %v73 = vld [vmem:[%s2 + $0x38] sm:$0xff]
    %v74 = vld [vmem:[%s2 + $0x40] sm:$0xff]
    %v75 = vld [vmem:[%s2 + $0x48] sm:$0xff]
    %v76 = vld [vmem:[%s2 + $0x50] sm:$0xff]
    %v77 = vld [vmem:[%s2 + $0x58] sm:$0xff]
    %79 = vset.pattern.permute.xlu0 0
    %80 = vperm.xlu0 %79, %v66
    %v81 = vpop.permute.xlu0 %80
    %84 = vset.pattern.permute.xlu0 0
    %85 = vperm.xlu0 %84, %v67
    %v86 = vpop.permute.xlu0 %85
    %89 = vset.pattern.permute.xlu0 0
    %90 = vperm.xlu0 %89, %v68
    %v91 = vpop.permute.xlu0 %90
    %94 = vset.pattern.permute.xlu0 0
    %95 = vperm.xlu0 %94, %v69
    %v96 = vpop.permute.xlu0 %95
    %99 = vset.pattern.permute.xlu0 0
    %100 = vperm.xlu0 %99, %v70
    %v101 = vpop.permute.xlu0 %100
    %104 = vset.pattern.permute.xlu0 0
    %105 = vperm.xlu0 %104, %v71
    %v106 = vpop.permute.xlu0 %105
    %109 = vset.pattern.permute.xlu0 0
    %110 = vperm.xlu0 %109, %v72
    %v111 = vpop.permute.xlu0 %110
    %114 = vset.pattern.permute.xlu0 0
    %115 = vperm.xlu0 %114, %v73
    %v116 = vpop.permute.xlu0 %115
    %119 = vset.pattern.permute.xlu0 0
    %120 = vperm.xlu0 %119, %v74
    %v121 = vpop.permute.xlu0 %120
    %124 = vset.pattern.permute.xlu0 0
    %125 = vperm.xlu0 %124, %v75
    %v126 = vpop.permute.xlu0 %125
    %129 = vset.pattern.permute.xlu0 0
    %130 = vperm.xlu0 %129, %v76
    %v131 = vpop.permute.xlu0 %130
    %134 = vset.pattern.permute.xlu0 0
    %135 = vperm.xlu0 %134, %v77
    %v136 = vpop.permute.xlu0 %135
    %vm138 = vcmask 64512
    %v140 = vsel %vm138, %v54, 0
    %v143 = vsel %vm138, %v55, 0
    %145 = vmatpush.msra.mxu0 0.0
    %146 = vmatpush.msra.mxu0 0.0
    %147 = vmatpush.msra.mxu0 0.0
    %148 = vmatpush.msra.mxu0 0.0
    %149 = vmatpush.msra.mxu0 0.0
    %150 = vmatpush.msra.mxu0 0.0
    %151 = vmatpush.msra.mxu0 0.0
    %152 = vmatpush.msra.mxu0 0.0
    %153 = vmatpush.msra.mxu0 0.0
    %154 = vmatpush.msra.mxu0 0.0
    %155 = vmatpush.msra.mxu0 0.0
    %156 = vmatpush.msra.mxu0 0.0
    %157 = vmatpush.msra.mxu0 0.0
    %158 = vmatpush.msra.mxu0 0.0
    %159 = vmatpush.msra.mxu0 0.0
    %160 = vmatpush.msra.mxu0 %v48
    %161 = vmatmul.f32.gmra.mxu0 %v140
    %v162 = vpop.f32.mrf.mxu0
    %v163 = vadd.f32 %v81, %v162
    %164 = vmatmul.f32.gmra.mxu0 %v143
    %v165 = vpop.f32.mrf.mxu0
    %v166 = vadd.f32 %v86, %v165
    %167 = vdwg.mxu0
    %v169 = vsel %vm138, %v56, 0
    %v172 = vsel %vm138, %v57, 0
    %174 = vmatpush.msra.mxu0 0.0
    %175 = vmatpush.msra.mxu0 0.0
    %176 = vmatpush.msra.mxu0 0.0
    %177 = vmatpush.msra.mxu0 0.0
    %178 = vmatpush.msra.mxu0 0.0
    %179 = vmatpush.msra.mxu0 0.0
    %180 = vmatpush.msra.mxu0 0.0
    %181 = vmatpush.msra.mxu0 0.0
    %182 = vmatpush.msra.mxu0 0.0
    %183 = vmatpush.msra.mxu0 0.0
    %184 = vmatpush.msra.mxu0 0.0
    %185 = vmatpush.msra.mxu0 0.0
    %186 = vmatpush.msra.mxu0 0.0
    %187 = vmatpush.msra.mxu0 0.0
    %188 = vmatpush.msra.mxu0 0.0
    %189 = vmatpush.msra.mxu0 %v49
    %190 = vmatmul.f32.gmra.mxu0 %v169
    %v191 = vpop.f32.mrf.mxu0
    %v192 = vadd.f32 %v91, %v191
    %193 = vmatmul.f32.gmra.mxu0 %v172
    %v194 = vpop.f32.mrf.mxu0
    %v195 = vadd.f32 %v96, %v194
    %196 = vdwg.mxu0
    %v198 = vsel %vm138, %v58, 0
    %v201 = vsel %vm138, %v59, 0
    %203 = vmatpush.msra.mxu0 0.0
    %204 = vmatpush.msra.mxu0 0.0
    %205 = vmatpush.msra.mxu0 0.0
    %206 = vmatpush.msra.mxu0 0.0
    %207 = vmatpush.msra.mxu0 0.0
    %208 = vmatpush.msra.mxu0 0.0
    %209 = vmatpush.msra.mxu0 0.0
    %210 = vmatpush.msra.mxu0 0.0
    %211 = vmatpush.msra.mxu0 0.0
    %212 = vmatpush.msra.mxu0 0.0
    %213 = vmatpush.msra.mxu0 0.0
    %214 = vmatpush.msra.mxu0 0.0
    %215 = vmatpush.msra.mxu0 0.0
    %216 = vmatpush.msra.mxu0 0.0
    %217 = vmatpush.msra.mxu0 0.0
    %218 = vmatpush.msra.mxu0 %v50
    %219 = vmatmul.f32.gmra.mxu0 %v198
    %v220 = vpop.f32.mrf.mxu0
    %v221 = vadd.f32 %v101, %v220
    %222 = vmatmul.f32.gmra.mxu0 %v201
    %v223 = vpop.f32.mrf.mxu0
    %v224 = vadd.f32 %v106, %v223
    %225 = vdwg.mxu0
    %v227 = vsel %vm138, %v60, 0
    %v230 = vsel %vm138, %v61, 0
    %232 = vmatpush.msra.mxu0 0.0
    %233 = vmatpush.msra.mxu0 0.0
    %234 = vmatpush.msra.mxu0 0.0
    %235 = vmatpush.msra.mxu0 0.0
    %236 = vmatpush.msra.mxu0 0.0
    %237 = vmatpush.msra.mxu0 0.0
    %238 = vmatpush.msra.mxu0 0.0
    %239 = vmatpush.msra.mxu0 0.0
    %240 = vmatpush.msra.mxu0 0.0
    %241 = vmatpush.msra.mxu0 0.0
    %242 = vmatpush.msra.mxu0 0.0
    %243 = vmatpush.msra.mxu0 0.0
    %244 = vmatpush.msra.mxu0 0.0
    %245 = vmatpush.msra.mxu0 0.0
    %246 = vmatpush.msra.mxu0 0.0
    %247 = vmatpush.msra.mxu0 %v51
    %248 = vmatmul.f32.gmra.mxu0 %v227
    %v249 = vpop.f32.mrf.mxu0
    %v250 = vadd.f32 %v111, %v249
    %251 = vmatmul.f32.gmra.mxu0 %v230
    %v252 = vpop.f32.mrf.mxu0
    %v253 = vadd.f32 %v116, %v252
    %254 = vdwg.mxu0
    %v256 = vsel %vm138, %v62, 0
    %v259 = vsel %vm138, %v63, 0
    %261 = vmatpush.msra.mxu0 0.0
    %262 = vmatpush.msra.mxu0 0.0
    %263 = vmatpush.msra.mxu0 0.0
    %264 = vmatpush.msra.mxu0 0.0
    %265 = vmatpush.msra.mxu0 0.0
    %266 = vmatpush.msra.mxu0 0.0
    %267 = vmatpush.msra.mxu0 0.0
    %268 = vmatpush.msra.mxu0 0.0
    %269 = vmatpush.msra.mxu0 0.0
    %270 = vmatpush.msra.mxu0 0.0
    %271 = vmatpush.msra.mxu0 0.0
    %272 = vmatpush.msra.mxu0 0.0
    %273 = vmatpush.msra.mxu0 0.0
    %274 = vmatpush.msra.mxu0 0.0
    %275 = vmatpush.msra.mxu0 0.0
    %276 = vmatpush.msra.mxu0 %v52
    %277 = vmatmul.f32.gmra.mxu0 %v256
    %v278 = vpop.f32.mrf.mxu0
    %v279 = vadd.f32 %v121, %v278
    %280 = vmatmul.f32.gmra.mxu0 %v259
    %v281 = vpop.f32.mrf.mxu0
    %v282 = vadd.f32 %v126, %v281
    %283 = vdwg.mxu0
    %v285 = vsel %vm138, %v64, 0
    %v288 = vsel %vm138, %v65, 0
    %290 = vmatpush.msra.mxu0 0.0
    %291 = vmatpush.msra.mxu0 0.0
    %292 = vmatpush.msra.mxu0 0.0
    %293 = vmatpush.msra.mxu0 0.0
    %294 = vmatpush.msra.mxu0 0.0
    %295 = vmatpush.msra.mxu0 0.0
    %296 = vmatpush.msra.mxu0 0.0
    %297 = vmatpush.msra.mxu0 0.0
    %298 = vmatpush.msra.mxu0 0.0
    %299 = vmatpush.msra.mxu0 0.0
    %300 = vmatpush.msra.mxu0 0.0
    %301 = vmatpush.msra.mxu0 0.0
    %302 = vmatpush.msra.mxu0 0.0
    %303 = vmatpush.msra.mxu0 0.0
    %304 = vmatpush.msra.mxu0 0.0
    %305 = vmatpush.msra.mxu0 %v53
    %306 = vmatmul.f32.gmra.mxu0 %v285
    %v307 = vpop.f32.mrf.mxu0
    %v308 = vadd.f32 %v131, %v307
    %309 = vmatmul.f32.gmra.mxu0 %v288
    %v310 = vpop.f32.mrf.mxu0
    %v311 = vadd.f32 %v136, %v310
    %312 = vdwg.mxu0
    %vm313 = vcmp.gt.f32.partialorder %v163, 0.0
    %vm314 = vcmp.gt.f32.partialorder %v166, 0.0
    %vm315 = vcmp.gt.f32.partialorder %v192, 0.0
    %vm316 = vcmp.gt.f32.partialorder %v195, 0.0
    %vm317 = vcmp.gt.f32.partialorder %v221, 0.0
    %vm318 = vcmp.gt.f32.partialorder %v224, 0.0
    %vm319 = vcmp.gt.f32.partialorder %v250, 0.0
    %vm320 = vcmp.gt.f32.partialorder %v253, 0.0
    %vm321 = vcmp.gt.f32.partialorder %v279, 0.0
    %vm322 = vcmp.gt.f32.partialorder %v282, 0.0
    %vm323 = vcmp.gt.f32.partialorder %v308, 0.0
    %vm324 = vcmp.gt.f32.partialorder %v311, 0.0
    %v325 = vld [vmem:[%s3] sm:$0xff]
    %v326 = vld [vmem:[%s3 + $0x8] sm:$0xff]
    %v327 = vld [vmem:[%s3 + $0x10] sm:$0xff]
    %v328 = vld [vmem:[%s3 + $0x18] sm:$0xff]
    %v329 = vld [vmem:[%s3 + $0x20] sm:$0xff]
    %v330 = vld [vmem:[%s3 + $0x28] sm:$0xff]
    %v331 = vld [vmem:[%s3 + $0x30] sm:$0xff]
    %v332 = vld [vmem:[%s3 + $0x38] sm:$0xff]
    %v333 = vld [vmem:[%s3 + $0x40] sm:$0xff]
    %v334 = vld [vmem:[%s3 + $0x48] sm:$0xff]
    %v335 = vld [vmem:[%s3 + $0x50] sm:$0xff]
    %v336 = vld [vmem:[%s3 + $0x58] sm:$0xff]
    %338 = vset.pattern.permute.xlu0 0
    %339 = vperm.xlu0 %338, %v325
    %v340 = vpop.permute.xlu0 %339
    %343 = vset.pattern.permute.xlu0 0
    %344 = vperm.xlu0 %343, %v326
    %v345 = vpop.permute.xlu0 %344
    %348 = vset.pattern.permute.xlu0 0
    %349 = vperm.xlu0 %348, %v327
    %v350 = vpop.permute.xlu0 %349
    %353 = vset.pattern.permute.xlu0 0
    %354 = vperm.xlu0 %353, %v328
    %v355 = vpop.permute.xlu0 %354
    %358 = vset.pattern.permute.xlu0 0
    %359 = vperm.xlu0 %358, %v329
    %v360 = vpop.permute.xlu0 %359
    %363 = vset.pattern.permute.xlu0 0
    %364 = vperm.xlu0 %363, %v330
    %v365 = vpop.permute.xlu0 %364
    %368 = vset.pattern.permute.xlu0 0
    %369 = vperm.xlu0 %368, %v331
    %v370 = vpop.permute.xlu0 %369
    %373 = vset.pattern.permute.xlu0 0
    %374 = vperm.xlu0 %373, %v332
    %v375 = vpop.permute.xlu0 %374
    %378 = vset.pattern.permute.xlu0 0
    %379 = vperm.xlu0 %378, %v333
    %v380 = vpop.permute.xlu0 %379
    %383 = vset.pattern.permute.xlu0 0
    %384 = vperm.xlu0 %383, %v334
    %v385 = vpop.permute.xlu0 %384
    %388 = vset.pattern.permute.xlu0 0
    %389 = vperm.xlu0 %388, %v335
    %v390 = vpop.permute.xlu0 %389
    %393 = vset.pattern.permute.xlu0 0
    %394 = vperm.xlu0 %393, %v336
    %v395 = vpop.permute.xlu0 %394
    %v397 = vmul.f32 %v340, %v163
    %v398 = vmul.f32 %v345, %v166
    %v399 = vmul.f32 %v350, %v192
    %v400 = vmul.f32 %v355, %v195
    %v401 = vmul.f32 %v360, %v221
    %v402 = vmul.f32 %v365, %v224
    %v403 = vmul.f32 %v370, %v250
    %v404 = vmul.f32 %v375, %v253
    %v405 = vmul.f32 %v380, %v279
    %v406 = vmul.f32 %v385, %v282
    %v407 = vmul.f32 %v390, %v308
    %v408 = vmul.f32 %v395, %v311
    %v409 = vsel %vm313, %v163, %v397
    %v410 = vsel %vm314, %v166, %v398
    %v411 = vsel %vm315, %v192, %v399
    %v412 = vsel %vm316, %v195, %v400
    %v413 = vsel %vm317, %v221, %v401
    %v414 = vsel %vm318, %v224, %v402
    %v415 = vsel %vm319, %v250, %v403
    %v416 = vsel %vm320, %v253, %v404
    %v417 = vsel %vm321, %v279, %v405
    %v418 = vsel %vm322, %v282, %v406
    %v419 = vsel %vm323, %v308, %v407
    %v420 = vsel %vm324, %v311, %v408
    %v421 = vld [vmem:[%s4] sm:$0xff]
    %v422 = vld [vmem:[%s4 + $0x8] sm:$0xff]
    %v423 = vld [vmem:[%s4 + $0x10] sm:$0xff]
    %v424 = vld [vmem:[%s4 + $0x18] sm:$0xff]
    %v425 = vld [vmem:[%s4 + $0x20] sm:$0xff]
    %v426 = vld [vmem:[%s4 + $0x28] sm:$0xff]
    %v427 = vld [vmem:[%s4 + $0x30] sm:$0xff]
    %v428 = vld [vmem:[%s4 + $0x38] sm:$0xff]
    %v429 = vld [vmem:[%s4 + $0x40] sm:$0xff]
    %v430 = vld [vmem:[%s4 + $0x48] sm:$0xff]
    %v431 = vld [vmem:[%s4 + $0x50] sm:$0xff]
    %v432 = vld [vmem:[%s4 + $0x58] sm:$0xff]
    %v433 = vld [vmem:[%s5] sm:$0xff]
    %v434 = vld [vmem:[%s5 + $0x8] sm:$0xff]
    %v435 = vld [vmem:[%s5 + $0x10] sm:$0xff]
    %v436 = vld [vmem:[%s5 + $0x18] sm:$0xff]
    %v437 = vld [vmem:[%s5 + $0x20] sm:$0xff]
    %v438 = vld [vmem:[%s5 + $0x28] sm:$0xff]
    %v439 = vld [vmem:[%s5 + $0x30] sm:$0xff]
    %v440 = vld [vmem:[%s5 + $0x38] sm:$0xff]
    %v441 = vld [vmem:[%s5 + $0x40] sm:$0xff]
    %v442 = vld [vmem:[%s5 + $0x48] sm:$0xff]
    %v443 = vld [vmem:[%s5 + $0x50] sm:$0xff]
    %v444 = vld [vmem:[%s5 + $0x58] sm:$0xff]
    %vm445 = vcmask 261120
    %v446 = vsel %vm445, %v409, 0.0
    %447 = vadd.xlane.f32.xlu0 %v446
    %v448 = vpop.xlane.xlu0 %447
    %v449 = vsel %vm445, %v410, 0.0
    %450 = vadd.xlane.f32.xlu0 %v449
    %v451 = vpop.xlane.xlu0 %450
    %v452 = vsel %vm445, %v411, 0.0
    %453 = vadd.xlane.f32.xlu0 %v452
    %v454 = vpop.xlane.xlu0 %453
    %v455 = vsel %vm445, %v412, 0.0
    %456 = vadd.xlane.f32.xlu0 %v455
    %v457 = vpop.xlane.xlu0 %456
    %v458 = vsel %vm445, %v413, 0.0
    %459 = vadd.xlane.f32.xlu0 %v458
    %v460 = vpop.xlane.xlu0 %459
    %v461 = vsel %vm445, %v414, 0.0
    %462 = vadd.xlane.f32.xlu0 %v461
    %v463 = vpop.xlane.xlu0 %462
    %v464 = vsel %vm445, %v415, 0.0
    %465 = vadd.xlane.f32.xlu0 %v464
    %v466 = vpop.xlane.xlu0 %465
    %v467 = vsel %vm445, %v416, 0.0
    %468 = vadd.xlane.f32.xlu0 %v467
    %v469 = vpop.xlane.xlu0 %468
    %v470 = vsel %vm445, %v417, 0.0
    %471 = vadd.xlane.f32.xlu0 %v470
    %v472 = vpop.xlane.xlu0 %471
    %v473 = vsel %vm445, %v418, 0.0
    %474 = vadd.xlane.f32.xlu0 %v473
    %v475 = vpop.xlane.xlu0 %474
    %v476 = vsel %vm445, %v419, 0.0
    %477 = vadd.xlane.f32.xlu0 %v476
    %v478 = vpop.xlane.xlu0 %477
    %v479 = vsel %vm445, %v420, 0.0
    %480 = vadd.xlane.f32.xlu0 %v479
    %v481 = vpop.xlane.xlu0 %480
    %v482 = vadd.f32 %v448, %v451
    %v483 = vrot.slane %v482, 4
    %v484 = vadd.f32 %v482, %v483
    %v485 = vrot.slane %v484, 2
    %v486 = vadd.f32 %v484, %v485
    %v487 = vrot.slane %v486, 1
    %v488 = vadd.f32 %v486, %v487
    %v489 = vadd.f32 %v454, %v457
    %v490 = vrot.slane %v489, 4
    %v491 = vadd.f32 %v489, %v490
    %v492 = vrot.slane %v491, 2
    %v493 = vadd.f32 %v491, %v492
    %v494 = vrot.slane %v493, 1
    %v495 = vadd.f32 %v493, %v494
    %v496 = vadd.f32 %v460, %v463
    %v497 = vrot.slane %v496, 4
    %v498 = vadd.f32 %v496, %v497
    %v499 = vrot.slane %v498, 2
    %v500 = vadd.f32 %v498, %v499
    %v501 = vrot.slane %v500, 1
    %v502 = vadd.f32 %v500, %v501
    %v503 = vadd.f32 %v466, %v469
    %v504 = vrot.slane %v503, 4
    %v505 = vadd.f32 %v503, %v504
    %v506 = vrot.slane %v505, 2
    %v507 = vadd.f32 %v505, %v506
    %v508 = vrot.slane %v507, 1
    %v509 = vadd.f32 %v507, %v508
    %v510 = vadd.f32 %v472, %v475
    %v511 = vrot.slane %v510, 4
    %v512 = vadd.f32 %v510, %v511
    %v513 = vrot.slane %v512, 2
    %v514 = vadd.f32 %v512, %v513
    %v515 = vrot.slane %v514, 1
    %v516 = vadd.f32 %v514, %v515
    %v517 = vadd.f32 %v478, %v481
    %v518 = vrot.slane %v517, 4
    %v519 = vadd.f32 %v517, %v518
    %v520 = vrot.slane %v519, 2
    %v521 = vadd.f32 %v519, %v520
    %v522 = vrot.slane %v521, 1
    %v523 = vadd.f32 %v521, %v522
    %v524 = vrcp.pop 512.0
    %v525 = vmul.f32 512.0, %v524
    %v526 = vsub.f32 1.0, %v525
    %v527 = vmul.f32 %v524, %v526
    %v528 = vadd.f32 %v524, %v527
    %vm529 = vweird.f32 %v524
    %v530 = vsel %vm529, %v524, %v528
    %v531 = vmul.f32 %v488, %v530
    %v532 = vmul.f32 %v495, %v530
    %v533 = vmul.f32 %v502, %v530
    %v534 = vmul.f32 %v509, %v530
    %v535 = vmul.f32 %v516, %v530
    %v536 = vmul.f32 %v523, %v530
    %v537 = vsub.f32 %v409, %v531
    %v538 = vsub.f32 %v410, %v531
    %v539 = vsub.f32 %v411, %v532
    %v540 = vsub.f32 %v412, %v532
    %v541 = vsub.f32 %v413, %v533
    %v542 = vsub.f32 %v414, %v533
    %v543 = vsub.f32 %v415, %v534
    %v544 = vsub.f32 %v416, %v534
    %v545 = vsub.f32 %v417, %v535
    %v546 = vsub.f32 %v418, %v535
    %v547 = vsub.f32 %v419, %v536
    %v548 = vsub.f32 %v420, %v536
    %v549 = vmul.f32 %v537, %v537
    %v550 = vmul.f32 %v538, %v538
    %v551 = vmul.f32 %v539, %v539
    %v552 = vmul.f32 %v540, %v540
    %v553 = vmul.f32 %v541, %v541
    %v554 = vmul.f32 %v542, %v542
    %v555 = vmul.f32 %v543, %v543
    %v556 = vmul.f32 %v544, %v544
    %v557 = vmul.f32 %v545, %v545
    %v558 = vmul.f32 %v546, %v546
    %v559 = vmul.f32 %v547, %v547
    %v560 = vmul.f32 %v548, %v548
    %v561 = vsel %vm445, %v549, 0.0
    %562 = vadd.xlane.f32.xlu0 %v561
    %v563 = vpop.xlane.xlu0 %562
    %v564 = vsel %vm445, %v550, 0.0
    %565 = vadd.xlane.f32.xlu0 %v564
    %v566 = vpop.xlane.xlu0 %565
    %v567 = vsel %vm445, %v551, 0.0
    %568 = vadd.xlane.f32.xlu0 %v567
    %v569 = vpop.xlane.xlu0 %568
    %v570 = vsel %vm445, %v552, 0.0
    %571 = vadd.xlane.f32.xlu0 %v570
    %v572 = vpop.xlane.xlu0 %571
    %v573 = vsel %vm445, %v553, 0.0
    %574 = vadd.xlane.f32.xlu0 %v573
    %v575 = vpop.xlane.xlu0 %574
    %v576 = vsel %vm445, %v554, 0.0
    %577 = vadd.xlane.f32.xlu0 %v576
    %v578 = vpop.xlane.xlu0 %577
    %v579 = vsel %vm445, %v555, 0.0
    %580 = vadd.xlane.f32.xlu0 %v579
    %v581 = vpop.xlane.xlu0 %580
    %v582 = vsel %vm445, %v556, 0.0
    %583 = vadd.xlane.f32.xlu0 %v582
    %v584 = vpop.xlane.xlu0 %583
    %v585 = vsel %vm445, %v557, 0.0
    %586 = vadd.xlane.f32.xlu0 %v585
    %v587 = vpop.xlane.xlu0 %586
    %v588 = vsel %vm445, %v558, 0.0
    %589 = vadd.xlane.f32.xlu0 %v588
    %v590 = vpop.xlane.xlu0 %589
    %v591 = vsel %vm445, %v559, 0.0
    %592 = vadd.xlane.f32.xlu0 %v591
    %v593 = vpop.xlane.xlu0 %592
    %v594 = vsel %vm445, %v560, 0.0
    %595 = vadd.xlane.f32.xlu0 %v594
    %v596 = vpop.xlane.xlu0 %595
    %v597 = vadd.f32 %v563, %v566
    %v598 = vrot.slane %v597, 4
    %v599 = vadd.f32 %v597, %v598
    %v600 = vrot.slane %v599, 2
    %v601 = vadd.f32 %v599, %v600
    %v602 = vrot.slane %v601, 1
    %v603 = vadd.f32 %v601, %v602
    %v604 = vadd.f32 %v569, %v572
    %v605 = vrot.slane %v604, 4
    %v606 = vadd.f32 %v604, %v605
    %v607 = vrot.slane %v606, 2
    %v608 = vadd.f32 %v606, %v607
    %v609 = vrot.slane %v608, 1
    %v610 = vadd.f32 %v608, %v609
    %v611 = vadd.f32 %v575, %v578
    %v612 = vrot.slane %v611, 4
    %v613 = vadd.f32 %v611, %v612
    %v614 = vrot.slane %v613, 2
    %v615 = vadd.f32 %v613, %v614
    %v616 = vrot.slane %v615, 1
    %v617 = vadd.f32 %v615, %v616
    %v618 = vadd.f32 %v581, %v584
    %v619 = vrot.slane %v618, 4
    %v620 = vadd.f32 %v618, %v619
    %v621 = vrot.slane %v620, 2
    %v622 = vadd.f32 %v620, %v621
    %v623 = vrot.slane %v622, 1
    %v624 = vadd.f32 %v622, %v623
    %v625 = vadd.f32 %v587, %v590
    %v626 = vrot.slane %v625, 4
    %v627 = vadd.f32 %v625, %v626
    %v628 = vrot.slane %v627, 2
    %v629 = vadd.f32 %v627, %v628
    %v630 = vrot.slane %v629, 1
    %v631 = vadd.f32 %v629, %v630
    %v632 = vadd.f32 %v593, %v596
    %v633 = vrot.slane %v632, 4
    %v634 = vadd.f32 %v632, %v633
    %v635 = vrot.slane %v634, 2
    %v636 = vadd.f32 %v634, %v635
    %v637 = vrot.slane %v636, 1
    %v638 = vadd.f32 %v636, %v637
    %v639 = vmul.f32 %v603, %v530
    %v640 = vmul.f32 %v610, %v530
    %v641 = vmul.f32 %v617, %v530
    %v642 = vmul.f32 %v624, %v530
    %v643 = vmul.f32 %v631, %v530
    %v644 = vmul.f32 %v638, %v530
    %v645 = vadd.f32 %v639, 1e-08
    %v646 = vadd.f32 %v640, 1e-08
    %v647 = vadd.f32 %v641, 1e-08
    %v648 = vadd.f32 %v642, 1e-08
    %v649 = vadd.f32 %v643, 1e-08
    %v650 = vadd.f32 %v644, 1e-08
    %v651 = vrsqrt.pop %v645
    %v652 = vmul.f32 %v651, %v645
    %v653 = vmul.f32 %v652, %v651
    %v654 = vmul.f32 0.5, %v653
    %v655 = vsub.f32 1.5, %v654
    %v656 = vmul.f32 %v651, %v655
    %vm657 = vweird.f32 %v645
    %vm658 = vweird.f32 %v651
    %vm659 = vmor %vm657, %vm658
    %v660 = vsel %vm659, %v651, %v656
    %v661 = vrsqrt.pop %v646
    %v662 = vmul.f32 %v661, %v646
    %v663 = vmul.f32 %v662, %v661
    %v664 = vmul.f32 0.5, %v663
    %v665 = vsub.f32 1.5, %v664
    %v666 = vmul.f32 %v661, %v665
    %vm667 = vweird.f32 %v646
    %vm668 = vweird.f32 %v661
    %vm669 = vmor %vm667, %vm668
    %v670 = vsel %vm669, %v661, %v666
    %v671 = vrsqrt.pop %v647
    %v672 = vmul.f32 %v671, %v647
    %v673 = vmul.f32 %v672, %v671
    %v674 = vmul.f32 0.5, %v673
    %v675 = vsub.f32 1.5, %v674
    %v676 = vmul.f32 %v671, %v675
    %vm677 = vweird.f32 %v647
    %vm678 = vweird.f32 %v671
    %vm679 = vmor %vm677, %vm678
    %v680 = vsel %vm679, %v671, %v676
    %v681 = vrsqrt.pop %v648
    %v682 = vmul.f32 %v681, %v648
    %v683 = vmul.f32 %v682, %v681
    %v684 = vmul.f32 0.5, %v683
    %v685 = vsub.f32 1.5, %v684
    %v686 = vmul.f32 %v681, %v685
    %vm687 = vweird.f32 %v648
    %vm688 = vweird.f32 %v681
    %vm689 = vmor %vm687, %vm688
    %v690 = vsel %vm689, %v681, %v686
    %v691 = vrsqrt.pop %v649
    %v692 = vmul.f32 %v691, %v649
    %v693 = vmul.f32 %v692, %v691
    %v694 = vmul.f32 0.5, %v693
    %v695 = vsub.f32 1.5, %v694
    %v696 = vmul.f32 %v691, %v695
    %vm697 = vweird.f32 %v649
    %vm698 = vweird.f32 %v691
    %vm699 = vmor %vm697, %vm698
    %v700 = vsel %vm699, %v691, %v696
    %v701 = vrsqrt.pop %v650
    %v702 = vmul.f32 %v701, %v650
    %v703 = vmul.f32 %v702, %v701
    %v704 = vmul.f32 0.5, %v703
    %v705 = vsub.f32 1.5, %v704
    %v706 = vmul.f32 %v701, %v705
    %vm707 = vweird.f32 %v650
    %vm708 = vweird.f32 %v701
    %vm709 = vmor %vm707, %vm708
    %v710 = vsel %vm709, %v701, %v706
    %v711 = vmul.f32 %v537, %v660
    %v712 = vmul.f32 %v538, %v660
    %v713 = vmul.f32 %v539, %v670
    %v714 = vmul.f32 %v540, %v670
    %v715 = vmul.f32 %v541, %v680
    %v716 = vmul.f32 %v542, %v680
    %v717 = vmul.f32 %v543, %v690
    %v718 = vmul.f32 %v544, %v690
    %v719 = vmul.f32 %v545, %v700
    %v720 = vmul.f32 %v546, %v700
    %v721 = vmul.f32 %v547, %v710
    %v722 = vmul.f32 %v548, %v710
    %724 = vset.pattern.permute.xlu0 0
    %725 = vperm.xlu0 %724, %v421
    %v726 = vpop.permute.xlu0 %725
    %729 = vset.pattern.permute.xlu0 0
    %730 = vperm.xlu0 %729, %v422
    %v731 = vpop.permute.xlu0 %730
    %734 = vset.pattern.permute.xlu0 0
    %735 = vperm.xlu0 %734, %v423
    %v736 = vpop.permute.xlu0 %735
    %739 = vset.pattern.permute.xlu0 0
    %740 = vperm.xlu0 %739, %v424
    %v741 = vpop.permute.xlu0 %740
    %744 = vset.pattern.permute.xlu0 0
    %745 = vperm.xlu0 %744, %v425
    %v746 = vpop.permute.xlu0 %745
    %749 = vset.pattern.permute.xlu0 0
    %750 = vperm.xlu0 %749, %v426
    %v751 = vpop.permute.xlu0 %750
    %754 = vset.pattern.permute.xlu0 0
    %755 = vperm.xlu0 %754, %v427
    %v756 = vpop.permute.xlu0 %755
    %759 = vset.pattern.permute.xlu0 0
    %760 = vperm.xlu0 %759, %v428
    %v761 = vpop.permute.xlu0 %760
    %764 = vset.pattern.permute.xlu0 0
    %765 = vperm.xlu0 %764, %v429
    %v766 = vpop.permute.xlu0 %765
    %769 = vset.pattern.permute.xlu0 0
    %770 = vperm.xlu0 %769, %v430
    %v771 = vpop.permute.xlu0 %770
    %774 = vset.pattern.permute.xlu0 0
    %775 = vperm.xlu0 %774, %v431
    %v776 = vpop.permute.xlu0 %775
    %779 = vset.pattern.permute.xlu0 0
    %780 = vperm.xlu0 %779, %v432
    %v781 = vpop.permute.xlu0 %780
    %v783 = vmul.f32 %v711, %v726
    %v784 = vmul.f32 %v712, %v731
    %v785 = vmul.f32 %v713, %v736
    %v786 = vmul.f32 %v714, %v741
    %v787 = vmul.f32 %v715, %v746
    %v788 = vmul.f32 %v716, %v751
    %v789 = vmul.f32 %v717, %v756
    %v790 = vmul.f32 %v718, %v761
    %v791 = vmul.f32 %v719, %v766
    %v792 = vmul.f32 %v720, %v771
    %v793 = vmul.f32 %v721, %v776
    %v794 = vmul.f32 %v722, %v781
    %796 = vset.pattern.permute.xlu0 0
    %797 = vperm.xlu0 %796, %v433
    %v798 = vpop.permute.xlu0 %797
    %801 = vset.pattern.permute.xlu0 0
    %802 = vperm.xlu0 %801, %v434
    %v803 = vpop.permute.xlu0 %802
    %806 = vset.pattern.permute.xlu0 0
    %807 = vperm.xlu0 %806, %v435
    %v808 = vpop.permute.xlu0 %807
    %811 = vset.pattern.permute.xlu0 0
    %812 = vperm.xlu0 %811, %v436
    %v813 = vpop.permute.xlu0 %812
    %816 = vset.pattern.permute.xlu0 0
    %817 = vperm.xlu0 %816, %v437
    %v818 = vpop.permute.xlu0 %817
    %821 = vset.pattern.permute.xlu0 0
    %822 = vperm.xlu0 %821, %v438
    %v823 = vpop.permute.xlu0 %822
    %826 = vset.pattern.permute.xlu0 0
    %827 = vperm.xlu0 %826, %v439
    %v828 = vpop.permute.xlu0 %827
    %831 = vset.pattern.permute.xlu0 0
    %832 = vperm.xlu0 %831, %v440
    %v833 = vpop.permute.xlu0 %832
    %836 = vset.pattern.permute.xlu0 0
    %837 = vperm.xlu0 %836, %v441
    %v838 = vpop.permute.xlu0 %837
    %841 = vset.pattern.permute.xlu0 0
    %842 = vperm.xlu0 %841, %v442
    %v843 = vpop.permute.xlu0 %842
    %846 = vset.pattern.permute.xlu0 0
    %847 = vperm.xlu0 %846, %v443
    %v848 = vpop.permute.xlu0 %847
    %851 = vset.pattern.permute.xlu0 0
    %852 = vperm.xlu0 %851, %v444
    %v853 = vpop.permute.xlu0 %852
    %v855 = vadd.f32 %v783, %v798
    %v856 = vadd.f32 %v784, %v803
    %v857 = vadd.f32 %v785, %v808
    %v858 = vadd.f32 %v786, %v813
    %v859 = vadd.f32 %v787, %v818
    %v860 = vadd.f32 %v788, %v823
    %v861 = vadd.f32 %v789, %v828
    %v862 = vadd.f32 %v790, %v833
    %v863 = vadd.f32 %v791, %v838
    %v864 = vadd.f32 %v792, %v843
    %v865 = vadd.f32 %v793, %v848
    %v866 = vadd.f32 %v794, %v853
    %879 = vrot.lane.b32.xlu0 %v855, 1
    %v880 = vpop.permute.xlu0 %879
    %881 = vrot.lane.b32.xlu0 %v856, 1
    %v882 = vpop.permute.xlu0 %881
    %883 = vrot.lane.b32.xlu0 %v857, 1
    %v884 = vpop.permute.xlu0 %883
    %885 = vrot.lane.b32.xlu0 %v858, 1
    %v886 = vpop.permute.xlu0 %885
    %887 = vrot.lane.b32.xlu0 %v859, 1
    %v888 = vpop.permute.xlu0 %887
    %889 = vrot.lane.b32.xlu0 %v860, 1
    %v890 = vpop.permute.xlu0 %889
    %891 = vrot.lane.b32.xlu0 %v861, 1
    %v892 = vpop.permute.xlu0 %891
    %893 = vrot.lane.b32.xlu0 %v862, 1
    %v894 = vpop.permute.xlu0 %893
    %895 = vrot.lane.b32.xlu0 %v863, 1
    %v896 = vpop.permute.xlu0 %895
    %897 = vrot.lane.b32.xlu0 %v864, 1
    %v898 = vpop.permute.xlu0 %897
    %899 = vrot.lane.b32.xlu0 %v865, 1
    %v900 = vpop.permute.xlu0 %899
    %901 = vrot.lane.b32.xlu0 %v866, 1
    %v902 = vpop.permute.xlu0 %901
    %vm915 = vcmask 7168
    %v916 = vsel %vm915, 0.0, %v880
    %v917 = vsel %vm915, 0.0, %v882
    %v918 = vsel %vm915, 0.0, %v884
    %v919 = vsel %vm915, 0.0, %v886
    %v920 = vsel %vm915, 0.0, %v888
    %v921 = vsel %vm915, 0.0, %v890
    %v922 = vsel %vm915, 0.0, %v892
    %v923 = vsel %vm915, 0.0, %v894
    %v924 = vsel %vm915, 0.0, %v896
    %v925 = vsel %vm915, 0.0, %v898
    %v926 = vsel %vm915, 0.0, %v900
    %v927 = vsel %vm915, 0.0, %v902
    %vm928 = vcmask 269312
    %v929 = vsel %vm928, %v916, 0.0
    %v930 = vsel %vm928, %v917, 0.0
    %v931 = vsel %vm928, %v918, 0.0
    %v932 = vsel %vm928, %v919, 0.0
    %v933 = vsel %vm928, %v920, 0.0
    %v934 = vsel %vm928, %v921, 0.0
    %v935 = vsel %vm928, %v922, 0.0
    %v936 = vsel %vm928, %v923, 0.0
    %v937 = vsel %vm928, %v924, 0.0
    %v938 = vsel %vm928, %v925, 0.0
    %v939 = vsel %vm928, %v926, 0.0
    %v940 = vsel %vm928, %v927, 0.0
    %v941 = vld [vmem:[%s6] sm:$0xff]
    %v942 = vld [vmem:[%s6 + $0x8] sm:$0xff]
    %v943 = vld [vmem:[%s6 + $0x10] sm:$0xff]
    %v944 = vld [vmem:[%s6 + $0x18] sm:$0xff]
    %v945 = vld [vmem:[%s6 + $0x20] sm:$0xff]
    %v946 = vld [vmem:[%s6 + $0x28] sm:$0xff]
    %v947 = vld [vmem:[%s6 + $0x30] sm:$0xff]
    %v948 = vld [vmem:[%s6 + $0x38] sm:$0xff]
    %v949 = vld [vmem:[%s6 + $0x40] sm:$0xff]
    %v950 = vld [vmem:[%s6 + $0x48] sm:$0xff]
    %v951 = vld [vmem:[%s6 + $0x50] sm:$0xff]
    %v952 = vld [vmem:[%s6 + $0x58] sm:$0xff]
    %954 = vset.pattern.permute.xlu0 0
    %955 = vperm.xlu0 %954, %v941
    %v956 = vpop.permute.xlu0 %955
    %959 = vset.pattern.permute.xlu0 0
    %960 = vperm.xlu0 %959, %v942
    %v961 = vpop.permute.xlu0 %960
    %964 = vset.pattern.permute.xlu0 0
    %965 = vperm.xlu0 %964, %v943
    %v966 = vpop.permute.xlu0 %965
    %969 = vset.pattern.permute.xlu0 0
    %970 = vperm.xlu0 %969, %v944
    %v971 = vpop.permute.xlu0 %970
    %974 = vset.pattern.permute.xlu0 0
    %975 = vperm.xlu0 %974, %v945
    %v976 = vpop.permute.xlu0 %975
    %979 = vset.pattern.permute.xlu0 0
    %980 = vperm.xlu0 %979, %v946
    %v981 = vpop.permute.xlu0 %980
    %984 = vset.pattern.permute.xlu0 0
    %985 = vperm.xlu0 %984, %v947
    %v986 = vpop.permute.xlu0 %985
    %989 = vset.pattern.permute.xlu0 0
    %990 = vperm.xlu0 %989, %v948
    %v991 = vpop.permute.xlu0 %990
    %994 = vset.pattern.permute.xlu0 0
    %995 = vperm.xlu0 %994, %v949
    %v996 = vpop.permute.xlu0 %995
    %999 = vset.pattern.permute.xlu0 0
    %1000 = vperm.xlu0 %999, %v950
    %v1001 = vpop.permute.xlu0 %1000
    %1004 = vset.pattern.permute.xlu0 0
    %1005 = vperm.xlu0 %1004, %v951
    %v1006 = vpop.permute.xlu0 %1005
    %1009 = vset.pattern.permute.xlu0 0
    %1010 = vperm.xlu0 %1009, %v952
    %v1011 = vpop.permute.xlu0 %1010
    %v1013 = vmul.f32 %v956, %v929
    %v1014 = vmul.f32 %v961, %v930
    %v1015 = vmul.f32 %v966, %v931
    %v1016 = vmul.f32 %v971, %v932
    %v1017 = vmul.f32 %v976, %v933
    %v1018 = vmul.f32 %v981, %v934
    %v1019 = vmul.f32 %v986, %v935
    %v1020 = vmul.f32 %v991, %v936
    %v1021 = vmul.f32 %v996, %v937
    %v1022 = vmul.f32 %v1001, %v938
    %v1023 = vmul.f32 %v1006, %v939
    %v1024 = vmul.f32 %v1011, %v940
    %v1025 = vadd.f32 %v1013, 0.0
    %v1026 = vadd.f32 %v1014, 0.0
    %v1027 = vadd.f32 %v1015, 0.0
    %v1028 = vadd.f32 %v1016, 0.0
    %v1029 = vadd.f32 %v1017, 0.0
    %v1030 = vadd.f32 %v1018, 0.0
    %v1031 = vadd.f32 %v1019, 0.0
    %v1032 = vadd.f32 %v1020, 0.0
    %v1033 = vadd.f32 %v1021, 0.0
    %v1034 = vadd.f32 %v1022, 0.0
    %v1035 = vadd.f32 %v1023, 0.0
    %v1036 = vadd.f32 %v1024, 0.0
    %s1037 = scalar_lea.vmem %s6, 96
    %v1038 = vld [vmem:[%s1037] sm:$0xff]
    %v1039 = vld [vmem:[%s1037 + $0x8] sm:$0xff]
    %v1040 = vld [vmem:[%s1037 + $0x10] sm:$0xff]
    %v1041 = vld [vmem:[%s1037 + $0x18] sm:$0xff]
    %v1042 = vld [vmem:[%s1037 + $0x20] sm:$0xff]
    %v1043 = vld [vmem:[%s1037 + $0x28] sm:$0xff]
    %v1044 = vld [vmem:[%s1037 + $0x30] sm:$0xff]
    %v1045 = vld [vmem:[%s1037 + $0x38] sm:$0xff]
    %v1046 = vld [vmem:[%s1037 + $0x40] sm:$0xff]
    %v1047 = vld [vmem:[%s1037 + $0x48] sm:$0xff]
    %v1048 = vld [vmem:[%s1037 + $0x50] sm:$0xff]
    %v1049 = vld [vmem:[%s1037 + $0x58] sm:$0xff]
    %1051 = vset.pattern.permute.xlu0 0
    %1052 = vperm.xlu0 %1051, %v1038
    %v1053 = vpop.permute.xlu0 %1052
    %1056 = vset.pattern.permute.xlu0 0
    %1057 = vperm.xlu0 %1056, %v1039
    %v1058 = vpop.permute.xlu0 %1057
    %1061 = vset.pattern.permute.xlu0 0
    %1062 = vperm.xlu0 %1061, %v1040
    %v1063 = vpop.permute.xlu0 %1062
    %1066 = vset.pattern.permute.xlu0 0
    %1067 = vperm.xlu0 %1066, %v1041
    %v1068 = vpop.permute.xlu0 %1067
    %1071 = vset.pattern.permute.xlu0 0
    %1072 = vperm.xlu0 %1071, %v1042
    %v1073 = vpop.permute.xlu0 %1072
    %1076 = vset.pattern.permute.xlu0 0
    %1077 = vperm.xlu0 %1076, %v1043
    %v1078 = vpop.permute.xlu0 %1077
    %1081 = vset.pattern.permute.xlu0 0
    %1082 = vperm.xlu0 %1081, %v1044
    %v1083 = vpop.permute.xlu0 %1082
    %1086 = vset.pattern.permute.xlu0 0
    %1087 = vperm.xlu0 %1086, %v1045
    %v1088 = vpop.permute.xlu0 %1087
    %1091 = vset.pattern.permute.xlu0 0
    %1092 = vperm.xlu0 %1091, %v1046
    %v1093 = vpop.permute.xlu0 %1092
    %1096 = vset.pattern.permute.xlu0 0
    %1097 = vperm.xlu0 %1096, %v1047
    %v1098 = vpop.permute.xlu0 %1097
    %1101 = vset.pattern.permute.xlu0 0
    %1102 = vperm.xlu0 %1101, %v1048
    %v1103 = vpop.permute.xlu0 %1102
    %1106 = vset.pattern.permute.xlu0 0
    %1107 = vperm.xlu0 %1106, %v1049
    %v1108 = vpop.permute.xlu0 %1107
    %v1110 = vmul.f32 %v1053, %v929
    %v1111 = vmul.f32 %v1058, %v930
    %v1112 = vmul.f32 %v1063, %v931
    %v1113 = vmul.f32 %v1068, %v932
    %v1114 = vmul.f32 %v1073, %v933
    %v1115 = vmul.f32 %v1078, %v934
    %v1116 = vmul.f32 %v1083, %v935
    %v1117 = vmul.f32 %v1088, %v936
    %v1118 = vmul.f32 %v1093, %v937
    %v1119 = vmul.f32 %v1098, %v938
    %v1120 = vmul.f32 %v1103, %v939
    %v1121 = vmul.f32 %v1108, %v940
    %1134 = vrot.lane.b32.xlu0 %v1110, 127
    %v1135 = vpop.permute.xlu0 %1134
    %1136 = vrot.lane.b32.xlu0 %v1111, 127
    %v1137 = vpop.permute.xlu0 %1136
    %1138 = vrot.lane.b32.xlu0 %v1112, 127
    %v1139 = vpop.permute.xlu0 %1138
    %1140 = vrot.lane.b32.xlu0 %v1113, 127
    %v1141 = vpop.permute.xlu0 %1140
    %1142 = vrot.lane.b32.xlu0 %v1114, 127
    %v1143 = vpop.permute.xlu0 %1142
    %1144 = vrot.lane.b32.xlu0 %v1115, 127
    %v1145 = vpop.permute.xlu0 %1144
    %1146 = vrot.lane.b32.xlu0 %v1116, 127
    %v1147 = vpop.permute.xlu0 %1146
    %1148 = vrot.lane.b32.xlu0 %v1117, 127
    %v1149 = vpop.permute.xlu0 %1148
    %1150 = vrot.lane.b32.xlu0 %v1118, 127
    %v1151 = vpop.permute.xlu0 %1150
    %1152 = vrot.lane.b32.xlu0 %v1119, 127
    %v1153 = vpop.permute.xlu0 %1152
    %1154 = vrot.lane.b32.xlu0 %v1120, 127
    %v1155 = vpop.permute.xlu0 %1154
    %1156 = vrot.lane.b32.xlu0 %v1121, 127
    %v1157 = vpop.permute.xlu0 %1156
    %v1170 = vadd.f32 %v1025, %v1135
    %v1171 = vadd.f32 %v1026, %v1137
    %v1172 = vadd.f32 %v1027, %v1139
    %v1173 = vadd.f32 %v1028, %v1141
    %v1174 = vadd.f32 %v1029, %v1143
    %v1175 = vadd.f32 %v1030, %v1145
    %v1176 = vadd.f32 %v1031, %v1147
    %v1177 = vadd.f32 %v1032, %v1149
    %v1178 = vadd.f32 %v1033, %v1151
    %v1179 = vadd.f32 %v1034, %v1153
    %v1180 = vadd.f32 %v1035, %v1155
    %v1181 = vadd.f32 %v1036, %v1157
    %s1182 = scalar_lea.vmem %s6, 192
    %v1183 = vld [vmem:[%s1182] sm:$0xff]
    %v1184 = vld [vmem:[%s1182 + $0x8] sm:$0xff]
    %v1185 = vld [vmem:[%s1182 + $0x10] sm:$0xff]
    %v1186 = vld [vmem:[%s1182 + $0x18] sm:$0xff]
    %v1187 = vld [vmem:[%s1182 + $0x20] sm:$0xff]
    %v1188 = vld [vmem:[%s1182 + $0x28] sm:$0xff]
    %v1189 = vld [vmem:[%s1182 + $0x30] sm:$0xff]
    %v1190 = vld [vmem:[%s1182 + $0x38] sm:$0xff]
    %v1191 = vld [vmem:[%s1182 + $0x40] sm:$0xff]
    %v1192 = vld [vmem:[%s1182 + $0x48] sm:$0xff]
    %v1193 = vld [vmem:[%s1182 + $0x50] sm:$0xff]
    %v1194 = vld [vmem:[%s1182 + $0x58] sm:$0xff]
    %1196 = vset.pattern.permute.xlu0 0
    %1197 = vperm.xlu0 %1196, %v1183
    %v1198 = vpop.permute.xlu0 %1197
    %1201 = vset.pattern.permute.xlu0 0
    %1202 = vperm.xlu0 %1201, %v1184
    %v1203 = vpop.permute.xlu0 %1202
    %1206 = vset.pattern.permute.xlu0 0
    %1207 = vperm.xlu0 %1206, %v1185
    %v1208 = vpop.permute.xlu0 %1207
    %1211 = vset.pattern.permute.xlu0 0
    %1212 = vperm.xlu0 %1211, %v1186
    %v1213 = vpop.permute.xlu0 %1212
    %1216 = vset.pattern.permute.xlu0 0
    %1217 = vperm.xlu0 %1216, %v1187
    %v1218 = vpop.permute.xlu0 %1217
    %1221 = vset.pattern.permute.xlu0 0
    %1222 = vperm.xlu0 %1221, %v1188
    %v1223 = vpop.permute.xlu0 %1222
    %1226 = vset.pattern.permute.xlu0 0
    %1227 = vperm.xlu0 %1226, %v1189
    %v1228 = vpop.permute.xlu0 %1227
    %1231 = vset.pattern.permute.xlu0 0
    %1232 = vperm.xlu0 %1231, %v1190
    %v1233 = vpop.permute.xlu0 %1232
    %1236 = vset.pattern.permute.xlu0 0
    %1237 = vperm.xlu0 %1236, %v1191
    %v1238 = vpop.permute.xlu0 %1237
    %1241 = vset.pattern.permute.xlu0 0
    %1242 = vperm.xlu0 %1241, %v1192
    %v1243 = vpop.permute.xlu0 %1242
    %1246 = vset.pattern.permute.xlu0 0
    %1247 = vperm.xlu0 %1246, %v1193
    %v1248 = vpop.permute.xlu0 %1247
    %1251 = vset.pattern.permute.xlu0 0
    %1252 = vperm.xlu0 %1251, %v1194
    %v1253 = vpop.permute.xlu0 %1252
    %v1255 = vmul.f32 %v1198, %v929
    %v1256 = vmul.f32 %v1203, %v930
    %v1257 = vmul.f32 %v1208, %v931
    %v1258 = vmul.f32 %v1213, %v932
    %v1259 = vmul.f32 %v1218, %v933
    %v1260 = vmul.f32 %v1223, %v934
    %v1261 = vmul.f32 %v1228, %v935
    %v1262 = vmul.f32 %v1233, %v936
    %v1263 = vmul.f32 %v1238, %v937
    %v1264 = vmul.f32 %v1243, %v938
    %v1265 = vmul.f32 %v1248, %v939
    %v1266 = vmul.f32 %v1253, %v940
    %1279 = vrot.lane.b32.xlu0 %v1255, 126
    %v1280 = vpop.permute.xlu0 %1279
    %1281 = vrot.lane.b32.xlu0 %v1256, 126
    %v1282 = vpop.permute.xlu0 %1281
    %1283 = vrot.lane.b32.xlu0 %v1257, 126
    %v1284 = vpop.permute.xlu0 %1283
    %1285 = vrot.lane.b32.xlu0 %v1258, 126
    %v1286 = vpop.permute.xlu0 %1285
    %1287 = vrot.lane.b32.xlu0 %v1259, 126
    %v1288 = vpop.permute.xlu0 %1287
    %1289 = vrot.lane.b32.xlu0 %v1260, 126
    %v1290 = vpop.permute.xlu0 %1289
    %1291 = vrot.lane.b32.xlu0 %v1261, 126
    %v1292 = vpop.permute.xlu0 %1291
    %1293 = vrot.lane.b32.xlu0 %v1262, 126
    %v1294 = vpop.permute.xlu0 %1293
    %1295 = vrot.lane.b32.xlu0 %v1263, 126
    %v1296 = vpop.permute.xlu0 %1295
    %1297 = vrot.lane.b32.xlu0 %v1264, 126
    %v1298 = vpop.permute.xlu0 %1297
    %1299 = vrot.lane.b32.xlu0 %v1265, 126
    %v1300 = vpop.permute.xlu0 %1299
    %1301 = vrot.lane.b32.xlu0 %v1266, 126
    %v1302 = vpop.permute.xlu0 %1301
    %v1315 = vadd.f32 %v1170, %v1280
    %v1316 = vadd.f32 %v1171, %v1282
    %v1317 = vadd.f32 %v1172, %v1284
    %v1318 = vadd.f32 %v1173, %v1286
    %v1319 = vadd.f32 %v1174, %v1288
    %v1320 = vadd.f32 %v1175, %v1290
    %v1321 = vadd.f32 %v1176, %v1292
    %v1322 = vadd.f32 %v1177, %v1294
    %v1323 = vadd.f32 %v1178, %v1296
    %v1324 = vadd.f32 %v1179, %v1298
    %v1325 = vadd.f32 %v1180, %v1300
    %v1326 = vadd.f32 %v1181, %v1302
    %v1327 = vld [vmem:[%s7] sm:$0xff]
    %v1328 = vld [vmem:[%s7 + $0x8] sm:$0xff]
    %v1329 = vld [vmem:[%s7 + $0x10] sm:$0xff]
    %v1330 = vld [vmem:[%s7 + $0x18] sm:$0xff]
    %v1331 = vld [vmem:[%s7 + $0x20] sm:$0xff]
    %v1332 = vld [vmem:[%s7 + $0x28] sm:$0xff]
    %v1333 = vld [vmem:[%s7 + $0x30] sm:$0xff]
    %v1334 = vld [vmem:[%s7 + $0x38] sm:$0xff]
    %v1335 = vld [vmem:[%s7 + $0x40] sm:$0xff]
    %v1336 = vld [vmem:[%s7 + $0x48] sm:$0xff]
    %v1337 = vld [vmem:[%s7 + $0x50] sm:$0xff]
    %v1338 = vld [vmem:[%s7 + $0x58] sm:$0xff]
    %1340 = vset.pattern.permute.xlu0 0
    %1341 = vperm.xlu0 %1340, %v1327
    %v1342 = vpop.permute.xlu0 %1341
    %1345 = vset.pattern.permute.xlu0 0
    %1346 = vperm.xlu0 %1345, %v1328
    %v1347 = vpop.permute.xlu0 %1346
    %1350 = vset.pattern.permute.xlu0 0
    %1351 = vperm.xlu0 %1350, %v1329
    %v1352 = vpop.permute.xlu0 %1351
    %1355 = vset.pattern.permute.xlu0 0
    %1356 = vperm.xlu0 %1355, %v1330
    %v1357 = vpop.permute.xlu0 %1356
    %1360 = vset.pattern.permute.xlu0 0
    %1361 = vperm.xlu0 %1360, %v1331
    %v1362 = vpop.permute.xlu0 %1361
    %1365 = vset.pattern.permute.xlu0 0
    %1366 = vperm.xlu0 %1365, %v1332
    %v1367 = vpop.permute.xlu0 %1366
    %1370 = vset.pattern.permute.xlu0 0
    %1371 = vperm.xlu0 %1370, %v1333
    %v1372 = vpop.permute.xlu0 %1371
    %1375 = vset.pattern.permute.xlu0 0
    %1376 = vperm.xlu0 %1375, %v1334
    %v1377 = vpop.permute.xlu0 %1376
    %1380 = vset.pattern.permute.xlu0 0
    %1381 = vperm.xlu0 %1380, %v1335
    %v1382 = vpop.permute.xlu0 %1381
    %1385 = vset.pattern.permute.xlu0 0
    %1386 = vperm.xlu0 %1385, %v1336
    %v1387 = vpop.permute.xlu0 %1386
    %1390 = vset.pattern.permute.xlu0 0
    %1391 = vperm.xlu0 %1390, %v1337
    %v1392 = vpop.permute.xlu0 %1391
    %1395 = vset.pattern.permute.xlu0 0
    %1396 = vperm.xlu0 %1395, %v1338
    %v1397 = vpop.permute.xlu0 %1396
    %v1399 = vadd.f32 %v1315, %v1342
    %v1400 = vadd.f32 %v1316, %v1347
    %v1401 = vadd.f32 %v1317, %v1352
    %v1402 = vadd.f32 %v1318, %v1357
    %v1403 = vadd.f32 %v1319, %v1362
    %v1404 = vadd.f32 %v1320, %v1367
    %v1405 = vadd.f32 %v1321, %v1372
    %v1406 = vadd.f32 %v1322, %v1377
    %v1407 = vadd.f32 %v1323, %v1382
    %v1408 = vadd.f32 %v1324, %v1387
    %v1409 = vadd.f32 %v1325, %v1392
    %v1410 = vadd.f32 %v1326, %v1397
    %vm1411 = vcmp.gt.f32.partialorder %v1399, 0.0
    %vm1412 = vcmp.gt.f32.partialorder %v1400, 0.0
    %vm1413 = vcmp.gt.f32.partialorder %v1401, 0.0
    %vm1414 = vcmp.gt.f32.partialorder %v1402, 0.0
    %vm1415 = vcmp.gt.f32.partialorder %v1403, 0.0
    %vm1416 = vcmp.gt.f32.partialorder %v1404, 0.0
    %vm1417 = vcmp.gt.f32.partialorder %v1405, 0.0
    %vm1418 = vcmp.gt.f32.partialorder %v1406, 0.0
    %vm1419 = vcmp.gt.f32.partialorder %v1407, 0.0
    %vm1420 = vcmp.gt.f32.partialorder %v1408, 0.0
    %vm1421 = vcmp.gt.f32.partialorder %v1409, 0.0
    %vm1422 = vcmp.gt.f32.partialorder %v1410, 0.0
    %s1423 = scalar_lea.vmem %s3, 96
    %v1424 = vld [vmem:[%s1423] sm:$0xff]
    %v1425 = vld [vmem:[%s1423 + $0x8] sm:$0xff]
    %v1426 = vld [vmem:[%s1423 + $0x10] sm:$0xff]
    %v1427 = vld [vmem:[%s1423 + $0x18] sm:$0xff]
    %v1428 = vld [vmem:[%s1423 + $0x20] sm:$0xff]
    %v1429 = vld [vmem:[%s1423 + $0x28] sm:$0xff]
    %v1430 = vld [vmem:[%s1423 + $0x30] sm:$0xff]
    %v1431 = vld [vmem:[%s1423 + $0x38] sm:$0xff]
    %v1432 = vld [vmem:[%s1423 + $0x40] sm:$0xff]
    %v1433 = vld [vmem:[%s1423 + $0x48] sm:$0xff]
    %v1434 = vld [vmem:[%s1423 + $0x50] sm:$0xff]
    %v1435 = vld [vmem:[%s1423 + $0x58] sm:$0xff]
    %1437 = vset.pattern.permute.xlu0 0
    %1438 = vperm.xlu0 %1437, %v1424
    %v1439 = vpop.permute.xlu0 %1438
    %1442 = vset.pattern.permute.xlu0 0
    %1443 = vperm.xlu0 %1442, %v1425
    %v1444 = vpop.permute.xlu0 %1443
    %1447 = vset.pattern.permute.xlu0 0
    %1448 = vperm.xlu0 %1447, %v1426
    %v1449 = vpop.permute.xlu0 %1448
    %1452 = vset.pattern.permute.xlu0 0
    %1453 = vperm.xlu0 %1452, %v1427
    %v1454 = vpop.permute.xlu0 %1453
    %1457 = vset.pattern.permute.xlu0 0
    %1458 = vperm.xlu0 %1457, %v1428
    %v1459 = vpop.permute.xlu0 %1458
    %1462 = vset.pattern.permute.xlu0 0
    %1463 = vperm.xlu0 %1462, %v1429
    %v1464 = vpop.permute.xlu0 %1463
    %1467 = vset.pattern.permute.xlu0 0
    %1468 = vperm.xlu0 %1467, %v1430
    %v1469 = vpop.permute.xlu0 %1468
    %1472 = vset.pattern.permute.xlu0 0
    %1473 = vperm.xlu0 %1472, %v1431
    %v1474 = vpop.permute.xlu0 %1473
    %1477 = vset.pattern.permute.xlu0 0
    %1478 = vperm.xlu0 %1477, %v1432
    %v1479 = vpop.permute.xlu0 %1478
    %1482 = vset.pattern.permute.xlu0 0
    %1483 = vperm.xlu0 %1482, %v1433
    %v1484 = vpop.permute.xlu0 %1483
    %1487 = vset.pattern.permute.xlu0 0
    %1488 = vperm.xlu0 %1487, %v1434
    %v1489 = vpop.permute.xlu0 %1488
    %1492 = vset.pattern.permute.xlu0 0
    %1493 = vperm.xlu0 %1492, %v1435
    %v1494 = vpop.permute.xlu0 %1493
    %v1496 = vmul.f32 %v1439, %v1399
    %v1497 = vmul.f32 %v1444, %v1400
    %v1498 = vmul.f32 %v1449, %v1401
    %v1499 = vmul.f32 %v1454, %v1402
    %v1500 = vmul.f32 %v1459, %v1403
    %v1501 = vmul.f32 %v1464, %v1404
    %v1502 = vmul.f32 %v1469, %v1405
    %v1503 = vmul.f32 %v1474, %v1406
    %v1504 = vmul.f32 %v1479, %v1407
    %v1505 = vmul.f32 %v1484, %v1408
    %v1506 = vmul.f32 %v1489, %v1409
    %v1507 = vmul.f32 %v1494, %v1410
    %v1508 = vsel %vm1411, %v1399, %v1496
    %v1509 = vsel %vm1412, %v1400, %v1497
    %v1510 = vsel %vm1413, %v1401, %v1498
    %v1511 = vsel %vm1414, %v1402, %v1499
    %v1512 = vsel %vm1415, %v1403, %v1500
    %v1513 = vsel %vm1416, %v1404, %v1501
    %v1514 = vsel %vm1417, %v1405, %v1502
    %v1515 = vsel %vm1418, %v1406, %v1503
    %v1516 = vsel %vm1419, %v1407, %v1504
    %v1517 = vsel %vm1420, %v1408, %v1505
    %v1518 = vsel %vm1421, %v1409, %v1506
    %v1519 = vsel %vm1422, %v1410, %v1507
    %v1520 = vld [vmem:[%s8] sm:$0xff]
    %v1521 = vld [vmem:[%s8 + $0x8] sm:$0xff]
    %v1522 = vld [vmem:[%s8 + $0x10] sm:$0xff]
    %v1523 = vld [vmem:[%s8 + $0x18] sm:$0xff]
    %v1524 = vld [vmem:[%s8 + $0x20] sm:$0xff]
    %v1525 = vld [vmem:[%s8 + $0x28] sm:$0xff]
    %v1526 = vld [vmem:[%s8 + $0x30] sm:$0xff]
    %v1527 = vld [vmem:[%s8 + $0x38] sm:$0xff]
    %v1528 = vld [vmem:[%s8 + $0x40] sm:$0xff]
    %v1529 = vld [vmem:[%s8 + $0x48] sm:$0xff]
    %v1530 = vld [vmem:[%s8 + $0x50] sm:$0xff]
    %v1531 = vld [vmem:[%s8 + $0x58] sm:$0xff]
    %v1532 = vld [vmem:[%s9] sm:$0xff]
    %v1533 = vld [vmem:[%s9 + $0x8] sm:$0xff]
    %v1534 = vld [vmem:[%s9 + $0x10] sm:$0xff]
    %v1535 = vld [vmem:[%s9 + $0x18] sm:$0xff]
    %v1536 = vld [vmem:[%s9 + $0x20] sm:$0xff]
    %v1537 = vld [vmem:[%s9 + $0x28] sm:$0xff]
    %v1538 = vld [vmem:[%s9 + $0x30] sm:$0xff]
    %v1539 = vld [vmem:[%s9 + $0x38] sm:$0xff]
    %v1540 = vld [vmem:[%s9 + $0x40] sm:$0xff]
    %v1541 = vld [vmem:[%s9 + $0x48] sm:$0xff]
    %v1542 = vld [vmem:[%s9 + $0x50] sm:$0xff]
    %v1543 = vld [vmem:[%s9 + $0x58] sm:$0xff]
    %v1544 = vsel %vm445, %v1508, 0.0
    %1545 = vadd.xlane.f32.xlu0 %v1544
    %v1546 = vpop.xlane.xlu0 %1545
    %v1547 = vsel %vm445, %v1509, 0.0
    %1548 = vadd.xlane.f32.xlu0 %v1547
    %v1549 = vpop.xlane.xlu0 %1548
    %v1550 = vsel %vm445, %v1510, 0.0
    %1551 = vadd.xlane.f32.xlu0 %v1550
    %v1552 = vpop.xlane.xlu0 %1551
    %v1553 = vsel %vm445, %v1511, 0.0
    %1554 = vadd.xlane.f32.xlu0 %v1553
    %v1555 = vpop.xlane.xlu0 %1554
    %v1556 = vsel %vm445, %v1512, 0.0
    %1557 = vadd.xlane.f32.xlu0 %v1556
    %v1558 = vpop.xlane.xlu0 %1557
    %v1559 = vsel %vm445, %v1513, 0.0
    %1560 = vadd.xlane.f32.xlu0 %v1559
    %v1561 = vpop.xlane.xlu0 %1560
    %v1562 = vsel %vm445, %v1514, 0.0
    %1563 = vadd.xlane.f32.xlu0 %v1562
    %v1564 = vpop.xlane.xlu0 %1563
    %v1565 = vsel %vm445, %v1515, 0.0
    %1566 = vadd.xlane.f32.xlu0 %v1565
    %v1567 = vpop.xlane.xlu0 %1566
    %v1568 = vsel %vm445, %v1516, 0.0
    %1569 = vadd.xlane.f32.xlu0 %v1568
    %v1570 = vpop.xlane.xlu0 %1569
    %v1571 = vsel %vm445, %v1517, 0.0
    %1572 = vadd.xlane.f32.xlu0 %v1571
    %v1573 = vpop.xlane.xlu0 %1572
    %v1574 = vsel %vm445, %v1518, 0.0
    %1575 = vadd.xlane.f32.xlu0 %v1574
    %v1576 = vpop.xlane.xlu0 %1575
    %v1577 = vsel %vm445, %v1519, 0.0
    %1578 = vadd.xlane.f32.xlu0 %v1577
    %v1579 = vpop.xlane.xlu0 %1578
    %v1580 = vadd.f32 %v1546, %v1549
    %v1581 = vrot.slane %v1580, 4
    %v1582 = vadd.f32 %v1580, %v1581
    %v1583 = vrot.slane %v1582, 2
    %v1584 = vadd.f32 %v1582, %v1583
    %v1585 = vrot.slane %v1584, 1
    %v1586 = vadd.f32 %v1584, %v1585
    %v1587 = vadd.f32 %v1552, %v1555
    %v1588 = vrot.slane %v1587, 4
    %v1589 = vadd.f32 %v1587, %v1588
    %v1590 = vrot.slane %v1589, 2
    %v1591 = vadd.f32 %v1589, %v1590
    %v1592 = vrot.slane %v1591, 1
    %v1593 = vadd.f32 %v1591, %v1592
    %v1594 = vadd.f32 %v1558, %v1561
    %v1595 = vrot.slane %v1594, 4
    %v1596 = vadd.f32 %v1594, %v1595
    %v1597 = vrot.slane %v1596, 2
    %v1598 = vadd.f32 %v1596, %v1597
    %v1599 = vrot.slane %v1598, 1
    %v1600 = vadd.f32 %v1598, %v1599
    %v1601 = vadd.f32 %v1564, %v1567
    %v1602 = vrot.slane %v1601, 4
    %v1603 = vadd.f32 %v1601, %v1602
    %v1604 = vrot.slane %v1603, 2
    %v1605 = vadd.f32 %v1603, %v1604
    %v1606 = vrot.slane %v1605, 1
    %v1607 = vadd.f32 %v1605, %v1606
    %v1608 = vadd.f32 %v1570, %v1573
    %v1609 = vrot.slane %v1608, 4
    %v1610 = vadd.f32 %v1608, %v1609
    %v1611 = vrot.slane %v1610, 2
    %v1612 = vadd.f32 %v1610, %v1611
    %v1613 = vrot.slane %v1612, 1
    %v1614 = vadd.f32 %v1612, %v1613
    %v1615 = vadd.f32 %v1576, %v1579
    %v1616 = vrot.slane %v1615, 4
    %v1617 = vadd.f32 %v1615, %v1616
    %v1618 = vrot.slane %v1617, 2
    %v1619 = vadd.f32 %v1617, %v1618
    %v1620 = vrot.slane %v1619, 1
    %v1621 = vadd.f32 %v1619, %v1620
    %v1622 = vmul.f32 %v1586, %v530
    %v1623 = vmul.f32 %v1593, %v530
    %v1624 = vmul.f32 %v1600, %v530
    %v1625 = vmul.f32 %v1607, %v530
    %v1626 = vmul.f32 %v1614, %v530
    %v1627 = vmul.f32 %v1621, %v530
    %v1628 = vsub.f32 %v1508, %v1622
    %v1629 = vsub.f32 %v1509, %v1622
    %v1630 = vsub.f32 %v1510, %v1623
    %v1631 = vsub.f32 %v1511, %v1623
    %v1632 = vsub.f32 %v1512, %v1624
    %v1633 = vsub.f32 %v1513, %v1624
    %v1634 = vsub.f32 %v1514, %v1625
    %v1635 = vsub.f32 %v1515, %v1625
    %v1636 = vsub.f32 %v1516, %v1626
    %v1637 = vsub.f32 %v1517, %v1626
    %v1638 = vsub.f32 %v1518, %v1627
    %v1639 = vsub.f32 %v1519, %v1627
    %v1640 = vmul.f32 %v1628, %v1628
    %v1641 = vmul.f32 %v1629, %v1629
    %v1642 = vmul.f32 %v1630, %v1630
    %v1643 = vmul.f32 %v1631, %v1631
    %v1644 = vmul.f32 %v1632, %v1632
    %v1645 = vmul.f32 %v1633, %v1633
    %v1646 = vmul.f32 %v1634, %v1634
    %v1647 = vmul.f32 %v1635, %v1635
    %v1648 = vmul.f32 %v1636, %v1636
    %v1649 = vmul.f32 %v1637, %v1637
    %v1650 = vmul.f32 %v1638, %v1638
    %v1651 = vmul.f32 %v1639, %v1639
    %v1652 = vsel %vm445, %v1640, 0.0
    %1653 = vadd.xlane.f32.xlu0 %v1652
    %v1654 = vpop.xlane.xlu0 %1653
    %v1655 = vsel %vm445, %v1641, 0.0
    %1656 = vadd.xlane.f32.xlu0 %v1655
    %v1657 = vpop.xlane.xlu0 %1656
    %v1658 = vsel %vm445, %v1642, 0.0
    %1659 = vadd.xlane.f32.xlu0 %v1658
    %v1660 = vpop.xlane.xlu0 %1659
    %v1661 = vsel %vm445, %v1643, 0.0
    %1662 = vadd.xlane.f32.xlu0 %v1661
    %v1663 = vpop.xlane.xlu0 %1662
    %v1664 = vsel %vm445, %v1644, 0.0
    %1665 = vadd.xlane.f32.xlu0 %v1664
    %v1666 = vpop.xlane.xlu0 %1665
    %v1667 = vsel %vm445, %v1645, 0.0
    %1668 = vadd.xlane.f32.xlu0 %v1667
    %v1669 = vpop.xlane.xlu0 %1668
    %v1670 = vsel %vm445, %v1646, 0.0
    %1671 = vadd.xlane.f32.xlu0 %v1670
    %v1672 = vpop.xlane.xlu0 %1671
    %v1673 = vsel %vm445, %v1647, 0.0
    %1674 = vadd.xlane.f32.xlu0 %v1673
    %v1675 = vpop.xlane.xlu0 %1674
    %v1676 = vsel %vm445, %v1648, 0.0
    %1677 = vadd.xlane.f32.xlu0 %v1676
    %v1678 = vpop.xlane.xlu0 %1677
    %v1679 = vsel %vm445, %v1649, 0.0
    %1680 = vadd.xlane.f32.xlu0 %v1679
    %v1681 = vpop.xlane.xlu0 %1680
    %v1682 = vsel %vm445, %v1650, 0.0
    %1683 = vadd.xlane.f32.xlu0 %v1682
    %v1684 = vpop.xlane.xlu0 %1683
    %v1685 = vsel %vm445, %v1651, 0.0
    %1686 = vadd.xlane.f32.xlu0 %v1685
    %v1687 = vpop.xlane.xlu0 %1686
    %v1688 = vadd.f32 %v1654, %v1657
    %v1689 = vrot.slane %v1688, 4
    %v1690 = vadd.f32 %v1688, %v1689
    %v1691 = vrot.slane %v1690, 2
    %v1692 = vadd.f32 %v1690, %v1691
    %v1693 = vrot.slane %v1692, 1
    %v1694 = vadd.f32 %v1692, %v1693
    %v1695 = vadd.f32 %v1660, %v1663
    %v1696 = vrot.slane %v1695, 4
    %v1697 = vadd.f32 %v1695, %v1696
    %v1698 = vrot.slane %v1697, 2
    %v1699 = vadd.f32 %v1697, %v1698
    %v1700 = vrot.slane %v1699, 1
    %v1701 = vadd.f32 %v1699, %v1700
    %v1702 = vadd.f32 %v1666, %v1669
    %v1703 = vrot.slane %v1702, 4
    %v1704 = vadd.f32 %v1702, %v1703
    %v1705 = vrot.slane %v1704, 2
    %v1706 = vadd.f32 %v1704, %v1705
    %v1707 = vrot.slane %v1706, 1
    %v1708 = vadd.f32 %v1706, %v1707
    %v1709 = vadd.f32 %v1672, %v1675
    %v1710 = vrot.slane %v1709, 4
    %v1711 = vadd.f32 %v1709, %v1710
    %v1712 = vrot.slane %v1711, 2
    %v1713 = vadd.f32 %v1711, %v1712
    %v1714 = vrot.slane %v1713, 1
    %v1715 = vadd.f32 %v1713, %v1714
    %v1716 = vadd.f32 %v1678, %v1681
    %v1717 = vrot.slane %v1716, 4
    %v1718 = vadd.f32 %v1716, %v1717
    %v1719 = vrot.slane %v1718, 2
    %v1720 = vadd.f32 %v1718, %v1719
    %v1721 = vrot.slane %v1720, 1
    %v1722 = vadd.f32 %v1720, %v1721
    %v1723 = vadd.f32 %v1684, %v1687
    %v1724 = vrot.slane %v1723, 4
    %v1725 = vadd.f32 %v1723, %v1724
    %v1726 = vrot.slane %v1725, 2
    %v1727 = vadd.f32 %v1725, %v1726
    %v1728 = vrot.slane %v1727, 1
    %v1729 = vadd.f32 %v1727, %v1728
    %v1730 = vmul.f32 %v1694, %v530
    %v1731 = vmul.f32 %v1701, %v530
    %v1732 = vmul.f32 %v1708, %v530
    %v1733 = vmul.f32 %v1715, %v530
    %v1734 = vmul.f32 %v1722, %v530
    %v1735 = vmul.f32 %v1729, %v530
    %v1736 = vadd.f32 %v1730, 1e-08
    %v1737 = vadd.f32 %v1731, 1e-08
    %v1738 = vadd.f32 %v1732, 1e-08
    %v1739 = vadd.f32 %v1733, 1e-08
    %v1740 = vadd.f32 %v1734, 1e-08
    %v1741 = vadd.f32 %v1735, 1e-08
    %v1742 = vrsqrt.pop %v1736
    %v1743 = vmul.f32 %v1742, %v1736
    %v1744 = vmul.f32 %v1743, %v1742
    %v1745 = vmul.f32 0.5, %v1744
    %v1746 = vsub.f32 1.5, %v1745
    %v1747 = vmul.f32 %v1742, %v1746
    %vm1748 = vweird.f32 %v1736
    %vm1749 = vweird.f32 %v1742
    %vm1750 = vmor %vm1748, %vm1749
    %v1751 = vsel %vm1750, %v1742, %v1747
    %v1752 = vrsqrt.pop %v1737
    %v1753 = vmul.f32 %v1752, %v1737
    %v1754 = vmul.f32 %v1753, %v1752
    %v1755 = vmul.f32 0.5, %v1754
    %v1756 = vsub.f32 1.5, %v1755
    %v1757 = vmul.f32 %v1752, %v1756
    %vm1758 = vweird.f32 %v1737
    %vm1759 = vweird.f32 %v1752
    %vm1760 = vmor %vm1758, %vm1759
    %v1761 = vsel %vm1760, %v1752, %v1757
    %v1762 = vrsqrt.pop %v1738
    %v1763 = vmul.f32 %v1762, %v1738
    %v1764 = vmul.f32 %v1763, %v1762
    %v1765 = vmul.f32 0.5, %v1764
    %v1766 = vsub.f32 1.5, %v1765
    %v1767 = vmul.f32 %v1762, %v1766
    %vm1768 = vweird.f32 %v1738
    %vm1769 = vweird.f32 %v1762
    %vm1770 = vmor %vm1768, %vm1769
    %v1771 = vsel %vm1770, %v1762, %v1767
    %v1772 = vrsqrt.pop %v1739
    %v1773 = vmul.f32 %v1772, %v1739
    %v1774 = vmul.f32 %v1773, %v1772
    %v1775 = vmul.f32 0.5, %v1774
    %v1776 = vsub.f32 1.5, %v1775
    %v1777 = vmul.f32 %v1772, %v1776
    %vm1778 = vweird.f32 %v1739
    %vm1779 = vweird.f32 %v1772
    %vm1780 = vmor %vm1778, %vm1779
    %v1781 = vsel %vm1780, %v1772, %v1777
    %v1782 = vrsqrt.pop %v1740
    %v1783 = vmul.f32 %v1782, %v1740
    %v1784 = vmul.f32 %v1783, %v1782
    %v1785 = vmul.f32 0.5, %v1784
    %v1786 = vsub.f32 1.5, %v1785
    %v1787 = vmul.f32 %v1782, %v1786
    %vm1788 = vweird.f32 %v1740
    %vm1789 = vweird.f32 %v1782
    %vm1790 = vmor %vm1788, %vm1789
    %v1791 = vsel %vm1790, %v1782, %v1787
    %v1792 = vrsqrt.pop %v1741
    %v1793 = vmul.f32 %v1792, %v1741
    %v1794 = vmul.f32 %v1793, %v1792
    %v1795 = vmul.f32 0.5, %v1794
    %v1796 = vsub.f32 1.5, %v1795
    %v1797 = vmul.f32 %v1792, %v1796
    %vm1798 = vweird.f32 %v1741
    %vm1799 = vweird.f32 %v1792
    %vm1800 = vmor %vm1798, %vm1799
    %v1801 = vsel %vm1800, %v1792, %v1797
    %v1802 = vmul.f32 %v1628, %v1751
    %v1803 = vmul.f32 %v1629, %v1751
    %v1804 = vmul.f32 %v1630, %v1761
    %v1805 = vmul.f32 %v1631, %v1761
    %v1806 = vmul.f32 %v1632, %v1771
    %v1807 = vmul.f32 %v1633, %v1771
    %v1808 = vmul.f32 %v1634, %v1781
    %v1809 = vmul.f32 %v1635, %v1781
    %v1810 = vmul.f32 %v1636, %v1791
    %v1811 = vmul.f32 %v1637, %v1791
    %v1812 = vmul.f32 %v1638, %v1801
    %v1813 = vmul.f32 %v1639, %v1801
    %1815 = vset.pattern.permute.xlu0 0
    %1816 = vperm.xlu0 %1815, %v1520
    %v1817 = vpop.permute.xlu0 %1816
    %1820 = vset.pattern.permute.xlu0 0
    %1821 = vperm.xlu0 %1820, %v1521
    %v1822 = vpop.permute.xlu0 %1821
    %1825 = vset.pattern.permute.xlu0 0
    %1826 = vperm.xlu0 %1825, %v1522
    %v1827 = vpop.permute.xlu0 %1826
    %1830 = vset.pattern.permute.xlu0 0
    %1831 = vperm.xlu0 %1830, %v1523
    %v1832 = vpop.permute.xlu0 %1831
    %1835 = vset.pattern.permute.xlu0 0
    %1836 = vperm.xlu0 %1835, %v1524
    %v1837 = vpop.permute.xlu0 %1836
    %1840 = vset.pattern.permute.xlu0 0
    %1841 = vperm.xlu0 %1840, %v1525
    %v1842 = vpop.permute.xlu0 %1841
    %1845 = vset.pattern.permute.xlu0 0
    %1846 = vperm.xlu0 %1845, %v1526
    %v1847 = vpop.permute.xlu0 %1846
    %1850 = vset.pattern.permute.xlu0 0
    %1851 = vperm.xlu0 %1850, %v1527
    %v1852 = vpop.permute.xlu0 %1851
    %1855 = vset.pattern.permute.xlu0 0
    %1856 = vperm.xlu0 %1855, %v1528
    %v1857 = vpop.permute.xlu0 %1856
    %1860 = vset.pattern.permute.xlu0 0
    %1861 = vperm.xlu0 %1860, %v1529
    %v1862 = vpop.permute.xlu0 %1861
    %1865 = vset.pattern.permute.xlu0 0
    %1866 = vperm.xlu0 %1865, %v1530
    %v1867 = vpop.permute.xlu0 %1866
    %1870 = vset.pattern.permute.xlu0 0
    %1871 = vperm.xlu0 %1870, %v1531
    %v1872 = vpop.permute.xlu0 %1871
    %v1874 = vmul.f32 %v1802, %v1817
    %v1875 = vmul.f32 %v1803, %v1822
    %v1876 = vmul.f32 %v1804, %v1827
    %v1877 = vmul.f32 %v1805, %v1832
    %v1878 = vmul.f32 %v1806, %v1837
    %v1879 = vmul.f32 %v1807, %v1842
    %v1880 = vmul.f32 %v1808, %v1847
    %v1881 = vmul.f32 %v1809, %v1852
    %v1882 = vmul.f32 %v1810, %v1857
    %v1883 = vmul.f32 %v1811, %v1862
    %v1884 = vmul.f32 %v1812, %v1867
    %v1885 = vmul.f32 %v1813, %v1872
    %1887 = vset.pattern.permute.xlu0 0
    %1888 = vperm.xlu0 %1887, %v1532
    %v1889 = vpop.permute.xlu0 %1888
    %1892 = vset.pattern.permute.xlu0 0
    %1893 = vperm.xlu0 %1892, %v1533
    %v1894 = vpop.permute.xlu0 %1893
    %1897 = vset.pattern.permute.xlu0 0
    %1898 = vperm.xlu0 %1897, %v1534
    %v1899 = vpop.permute.xlu0 %1898
    %1902 = vset.pattern.permute.xlu0 0
    %1903 = vperm.xlu0 %1902, %v1535
    %v1904 = vpop.permute.xlu0 %1903
    %1907 = vset.pattern.permute.xlu0 0
    %1908 = vperm.xlu0 %1907, %v1536
    %v1909 = vpop.permute.xlu0 %1908
    %1912 = vset.pattern.permute.xlu0 0
    %1913 = vperm.xlu0 %1912, %v1537
    %v1914 = vpop.permute.xlu0 %1913
    %1917 = vset.pattern.permute.xlu0 0
    %1918 = vperm.xlu0 %1917, %v1538
    %v1919 = vpop.permute.xlu0 %1918
    %1922 = vset.pattern.permute.xlu0 0
    %1923 = vperm.xlu0 %1922, %v1539
    %v1924 = vpop.permute.xlu0 %1923
    %1927 = vset.pattern.permute.xlu0 0
    %1928 = vperm.xlu0 %1927, %v1540
    %v1929 = vpop.permute.xlu0 %1928
    %1932 = vset.pattern.permute.xlu0 0
    %1933 = vperm.xlu0 %1932, %v1541
    %v1934 = vpop.permute.xlu0 %1933
    %1937 = vset.pattern.permute.xlu0 0
    %1938 = vperm.xlu0 %1937, %v1542
    %v1939 = vpop.permute.xlu0 %1938
    %1942 = vset.pattern.permute.xlu0 0
    %1943 = vperm.xlu0 %1942, %v1543
    %v1944 = vpop.permute.xlu0 %1943
    %v1946 = vadd.f32 %v1874, %v1889
    %v1947 = vadd.f32 %v1875, %v1894
    %v1948 = vadd.f32 %v1876, %v1899
    %v1949 = vadd.f32 %v1877, %v1904
    %v1950 = vadd.f32 %v1878, %v1909
    %v1951 = vadd.f32 %v1879, %v1914
    %v1952 = vadd.f32 %v1880, %v1919
    %v1953 = vadd.f32 %v1881, %v1924
    %v1954 = vadd.f32 %v1882, %v1929
    %v1955 = vadd.f32 %v1883, %v1934
    %v1956 = vadd.f32 %v1884, %v1939
    %v1957 = vadd.f32 %v1885, %v1944
    %v1958 = vld [vmem:[%s10] sm:$0xff]
    %v1959 = vld [vmem:[%s10 + $0x8] sm:$0xff]
    %v1960 = vld [vmem:[%s10 + $0x10] sm:$0xff]
    %v1961 = vld [vmem:[%s10 + $0x18] sm:$0xff]
    %v1962 = vld [vmem:[%s10 + $0x20] sm:$0xff]
    %v1963 = vld [vmem:[%s10 + $0x28] sm:$0xff]
    %v1964 = vld [vmem:[%s11] sm:$0xff]
    %v1965 = vld [vmem:[%s11 + $0x8] sm:$0xff]
    %v1966 = vld [vmem:[%s11 + $0x10] sm:$0xff]
    %v1967 = vld [vmem:[%s11 + $0x18] sm:$0xff]
    %v1968 = vld [vmem:[%s11 + $0x20] sm:$0xff]
    %v1969 = vld [vmem:[%s11 + $0x28] sm:$0xff]
    %1971 = vset.pattern.permute.xlu0 0
    %1972 = vperm.xlu0 %1971, %v1964
    %v1973 = vpop.permute.xlu0 %1972
    %1976 = vset.pattern.permute.xlu0 0
    %1977 = vperm.xlu0 %1976, %v1965
    %v1978 = vpop.permute.xlu0 %1977
    %1981 = vset.pattern.permute.xlu0 0
    %1982 = vperm.xlu0 %1981, %v1966
    %v1983 = vpop.permute.xlu0 %1982
    %1986 = vset.pattern.permute.xlu0 0
    %1987 = vperm.xlu0 %1986, %v1967
    %v1988 = vpop.permute.xlu0 %1987
    %1991 = vset.pattern.permute.xlu0 0
    %1992 = vperm.xlu0 %1991, %v1968
    %v1993 = vpop.permute.xlu0 %1992
    %1996 = vset.pattern.permute.xlu0 0
    %1997 = vperm.xlu0 %1996, %v1969
    %v1998 = vpop.permute.xlu0 %1997
    %vm2000 = vcmask 130048
    %v2002 = vsel %vm2000, %v1958, 0
    %2004 = vmatpush.msra.mxu0 0.0
    %2005 = vmatpush.msra.mxu0 0.0
    %2006 = vmatpush.msra.mxu0 0.0
    %2007 = vmatpush.msra.mxu0 0.0
    %2008 = vmatpush.msra.mxu0 0.0
    %2009 = vmatpush.msra.mxu0 0.0
    %2010 = vmatpush.msra.mxu0 0.0
    %2011 = vmatpush.msra.mxu0 0.0
    %2012 = vmatpush.msra.mxu0 0.0
    %2013 = vmatpush.msra.mxu0 0.0
    %2014 = vmatpush.msra.mxu0 0.0
    %2015 = vmatpush.msra.mxu0 0.0
    %2016 = vmatpush.msra.mxu0 0.0
    %2017 = vmatpush.msra.mxu0 0.0
    %2018 = vmatpush.msra.mxu0 %v1947
    %2019 = vmatpush.msra.mxu0 %v1946
    %2020 = vmatmul.f32.gmra.mxu0 %v2002
    %v2021 = vpop.f32.mrf.mxu0
    %v2022 = vadd.f32 %v1973, %v2021
    %2023 = vdwg.mxu0
    %v2025 = vsel %vm2000, %v1959, 0
    %2027 = vmatpush.msra.mxu0 0.0
    %2028 = vmatpush.msra.mxu0 0.0
    %2029 = vmatpush.msra.mxu0 0.0
    %2030 = vmatpush.msra.mxu0 0.0
    %2031 = vmatpush.msra.mxu0 0.0
    %2032 = vmatpush.msra.mxu0 0.0
    %2033 = vmatpush.msra.mxu0 0.0
    %2034 = vmatpush.msra.mxu0 0.0
    %2035 = vmatpush.msra.mxu0 0.0
    %2036 = vmatpush.msra.mxu0 0.0
    %2037 = vmatpush.msra.mxu0 0.0
    %2038 = vmatpush.msra.mxu0 0.0
    %2039 = vmatpush.msra.mxu0 0.0
    %2040 = vmatpush.msra.mxu0 0.0
    %2041 = vmatpush.msra.mxu0 %v1949
    %2042 = vmatpush.msra.mxu0 %v1948
    %2043 = vmatmul.f32.gmra.mxu0 %v2025
    %v2044 = vpop.f32.mrf.mxu0
    %v2045 = vadd.f32 %v1978, %v2044
    %2046 = vdwg.mxu0
    %v2048 = vsel %vm2000, %v1960, 0
    %2050 = vmatpush.msra.mxu0 0.0
    %2051 = vmatpush.msra.mxu0 0.0
    %2052 = vmatpush.msra.mxu0 0.0
    %2053 = vmatpush.msra.mxu0 0.0
    %2054 = vmatpush.msra.mxu0 0.0
    %2055 = vmatpush.msra.mxu0 0.0
    %2056 = vmatpush.msra.mxu0 0.0
    %2057 = vmatpush.msra.mxu0 0.0
    %2058 = vmatpush.msra.mxu0 0.0
    %2059 = vmatpush.msra.mxu0 0.0
    %2060 = vmatpush.msra.mxu0 0.0
    %2061 = vmatpush.msra.mxu0 0.0
    %2062 = vmatpush.msra.mxu0 0.0
    %2063 = vmatpush.msra.mxu0 0.0
    %2064 = vmatpush.msra.mxu0 %v1951
    %2065 = vmatpush.msra.mxu0 %v1950
    %2066 = vmatmul.f32.gmra.mxu0 %v2048
    %v2067 = vpop.f32.mrf.mxu0
    %v2068 = vadd.f32 %v1983, %v2067
    %2069 = vdwg.mxu0
    %v2071 = vsel %vm2000, %v1961, 0
    %2073 = vmatpush.msra.mxu0 0.0
    %2074 = vmatpush.msra.mxu0 0.0
    %2075 = vmatpush.msra.mxu0 0.0
    %2076 = vmatpush.msra.mxu0 0.0
    %2077 = vmatpush.msra.mxu0 0.0
    %2078 = vmatpush.msra.mxu0 0.0
    %2079 = vmatpush.msra.mxu0 0.0
    %2080 = vmatpush.msra.mxu0 0.0
    %2081 = vmatpush.msra.mxu0 0.0
    %2082 = vmatpush.msra.mxu0 0.0
    %2083 = vmatpush.msra.mxu0 0.0
    %2084 = vmatpush.msra.mxu0 0.0
    %2085 = vmatpush.msra.mxu0 0.0
    %2086 = vmatpush.msra.mxu0 0.0
    %2087 = vmatpush.msra.mxu0 %v1953
    %2088 = vmatpush.msra.mxu0 %v1952
    %2089 = vmatmul.f32.gmra.mxu0 %v2071
    %v2090 = vpop.f32.mrf.mxu0
    %v2091 = vadd.f32 %v1988, %v2090
    %2092 = vdwg.mxu0
    %v2094 = vsel %vm2000, %v1962, 0
    %2096 = vmatpush.msra.mxu0 0.0
    %2097 = vmatpush.msra.mxu0 0.0
    %2098 = vmatpush.msra.mxu0 0.0
    %2099 = vmatpush.msra.mxu0 0.0
    %2100 = vmatpush.msra.mxu0 0.0
    %2101 = vmatpush.msra.mxu0 0.0
    %2102 = vmatpush.msra.mxu0 0.0
    %2103 = vmatpush.msra.mxu0 0.0
    %2104 = vmatpush.msra.mxu0 0.0
    %2105 = vmatpush.msra.mxu0 0.0
    %2106 = vmatpush.msra.mxu0 0.0
    %2107 = vmatpush.msra.mxu0 0.0
    %2108 = vmatpush.msra.mxu0 0.0
    %2109 = vmatpush.msra.mxu0 0.0
    %2110 = vmatpush.msra.mxu0 %v1955
    %2111 = vmatpush.msra.mxu0 %v1954
    %2112 = vmatmul.f32.gmra.mxu0 %v2094
    %v2113 = vpop.f32.mrf.mxu0
    %v2114 = vadd.f32 %v1993, %v2113
    %2115 = vdwg.mxu0
    %v2117 = vsel %vm2000, %v1963, 0
    %2119 = vmatpush.msra.mxu0 0.0
    %2120 = vmatpush.msra.mxu0 0.0
    %2121 = vmatpush.msra.mxu0 0.0
    %2122 = vmatpush.msra.mxu0 0.0
    %2123 = vmatpush.msra.mxu0 0.0
    %2124 = vmatpush.msra.mxu0 0.0
    %2125 = vmatpush.msra.mxu0 0.0
    %2126 = vmatpush.msra.mxu0 0.0
    %2127 = vmatpush.msra.mxu0 0.0
    %2128 = vmatpush.msra.mxu0 0.0
    %2129 = vmatpush.msra.mxu0 0.0
    %2130 = vmatpush.msra.mxu0 0.0
    %2131 = vmatpush.msra.mxu0 0.0
    %2132 = vmatpush.msra.mxu0 0.0
    %2133 = vmatpush.msra.mxu0 %v1957
    %2134 = vmatpush.msra.mxu0 %v1956
    %2135 = vmatmul.f32.gmra.mxu0 %v2117
    %v2136 = vpop.f32.mrf.mxu0
    %v2137 = vadd.f32 %v1998, %v2136
    %2138 = vdwg.mxu0
    %v2139 = vmul.f32 %v2022, 0.25
    %v2141 = vsel %vm2000, %v2139, 0
    %v2144 = vsel %vm2000, %v2068, 0
    %2146 = vmatpush.xpose.msra.mxu0 0.0
    %2147 = vmatpush.xpose.msra.mxu0 0.0
    %2148 = vmatpush.xpose.msra.mxu0 0.0
    %2149 = vmatpush.xpose.msra.mxu0 0.0
    %2150 = vmatpush.xpose.msra.mxu0 0.0
    %2151 = vmatpush.xpose.msra.mxu0 0.0
    %2152 = vmatpush.xpose.msra.mxu0 0.0
    %2153 = vmatpush.xpose.msra.mxu0 0.0
    %2154 = vmatpush.xpose.msra.mxu0 0.0
    %2155 = vmatpush.xpose.msra.mxu0 0.0
    %2156 = vmatpush.xpose.msra.mxu0 0.0
    %2157 = vmatpush.xpose.msra.mxu0 0.0
    %2158 = vmatpush.xpose.msra.mxu0 0.0
    %2159 = vmatpush.xpose.msra.mxu0 0.0
    %2160 = vmatpush.xpose.msra.mxu0 0.0
    %2161 = vmatpush.xpose.msra.mxu0 %v2144
    %2162 = vmatmul.f32.gmra.mxu0 %v2141
    %v2163 = vpop.f32.mrf.mxu0
    %v2164 = vadd.f32 0.0, %v2163
    %2165 = vdwg.mxu0
    %v2166 = vsel %vm138, %v2164, -inf
    %2167 = vmax.xlane.f32.xlu0 %v2166
    %v2168 = vpop.xlane.xlu0 %2167
    %v2169 = vsub.f32 %v2164, %v2168
    %v2170 = vmul.f32 %v2169, 1.442695
    %v2171 = vpow.pop %v2170
    %v2172 = vsel %vm138, %v2171, 0.0
    %2173 = vadd.xlane.f32.xlu0 %v2172
    %v2174 = vpop.xlane.xlu0 %2173
    %v2175 = vrcp.pop %v2174
    %v2176 = vmul.f32 %v2171, %v2175
    %v2178 = vsel %vm138, %v2176, 0
    %2180 = vmatpush.msra.mxu0 0.0
    %2181 = vmatpush.msra.mxu0 0.0
    %2182 = vmatpush.msra.mxu0 0.0
    %2183 = vmatpush.msra.mxu0 0.0
    %2184 = vmatpush.msra.mxu0 0.0
    %2185 = vmatpush.msra.mxu0 0.0
    %2186 = vmatpush.msra.mxu0 0.0
    %2187 = vmatpush.msra.mxu0 0.0
    %2188 = vmatpush.msra.mxu0 0.0
    %2189 = vmatpush.msra.mxu0 0.0
    %2190 = vmatpush.msra.mxu0 0.0
    %2191 = vmatpush.msra.mxu0 0.0
    %2192 = vmatpush.msra.mxu0 0.0
    %2193 = vmatpush.msra.mxu0 0.0
    %2194 = vmatpush.msra.mxu0 0.0
    %2195 = vmatpush.msra.mxu0 %v2114
    %2196 = vmatmul.f32.gmra.mxu0 %v2178
    %v2197 = vpop.f32.mrf.mxu0
    %v2198 = vadd.f32 0.0, %v2197
    %2199 = vdwg.mxu0
    %2200 = vrot.lane.b32.xlu0 %v2139, 112
    %v2201 = vpop.permute.xlu0 %2200
    %2202 = vrot.lane.b32.xlu0 %v2068, 112
    %v2203 = vpop.permute.xlu0 %2202
    %v2204 = vsel %vm2000, %v2201, 0
    %v2206 = vsel %vm2000, %v2203, 0
    %2208 = vmatpush.xpose.msra.mxu0 0.0
    %2209 = vmatpush.xpose.msra.mxu0 0.0
    %2210 = vmatpush.xpose.msra.mxu0 0.0
    %2211 = vmatpush.xpose.msra.mxu0 0.0
    %2212 = vmatpush.xpose.msra.mxu0 0.0
    %2213 = vmatpush.xpose.msra.mxu0 0.0
    %2214 = vmatpush.xpose.msra.mxu0 0.0
    %2215 = vmatpush.xpose.msra.mxu0 0.0
    %2216 = vmatpush.xpose.msra.mxu0 0.0
    %2217 = vmatpush.xpose.msra.mxu0 0.0
    %2218 = vmatpush.xpose.msra.mxu0 0.0
    %2219 = vmatpush.xpose.msra.mxu0 0.0
    %2220 = vmatpush.xpose.msra.mxu0 0.0
    %2221 = vmatpush.xpose.msra.mxu0 0.0
    %2222 = vmatpush.xpose.msra.mxu0 0.0
    %2223 = vmatpush.xpose.msra.mxu0 %v2206
    %2224 = vmatmul.f32.gmra.mxu0 %v2204
    %v2225 = vpop.f32.mrf.mxu0
    %v2226 = vadd.f32 0.0, %v2225
    %2227 = vdwg.mxu0
    %v2228 = vsel %vm138, %v2226, -inf
    %2229 = vmax.xlane.f32.xlu0 %v2228
    %v2230 = vpop.xlane.xlu0 %2229
    %v2231 = vsub.f32 %v2226, %v2230
    %v2232 = vmul.f32 %v2231, 1.442695
    %v2233 = vpow.pop %v2232
    %v2234 = vsel %vm138, %v2233, 0.0
    %2235 = vadd.xlane.f32.xlu0 %v2234
    %v2236 = vpop.xlane.xlu0 %2235
    %v2237 = vrcp.pop %v2236
    %v2238 = vmul.f32 %v2233, %v2237
    %2240 = vrot.lane.b32.xlu0 %v2114, 112
    %v2241 = vpop.permute.xlu0 %2240
    %v2244 = vsel %vm138, %v2238, 0
    %2246 = vmatpush.msra.mxu0 0.0
    %2247 = vmatpush.msra.mxu0 0.0
    %2248 = vmatpush.msra.mxu0 0.0
    %2249 = vmatpush.msra.mxu0 0.0
    %2250 = vmatpush.msra.mxu0 0.0
    %2251 = vmatpush.msra.mxu0 0.0
    %2252 = vmatpush.msra.mxu0 0.0
    %2253 = vmatpush.msra.mxu0 0.0
    %2254 = vmatpush.msra.mxu0 0.0
    %2255 = vmatpush.msra.mxu0 0.0
    %2256 = vmatpush.msra.mxu0 0.0
    %2257 = vmatpush.msra.mxu0 0.0
    %2258 = vmatpush.msra.mxu0 0.0
    %2259 = vmatpush.msra.mxu0 0.0
    %2260 = vmatpush.msra.mxu0 0.0
    %2261 = vmatpush.msra.mxu0 %v2241
    %2262 = vmatmul.f32.gmra.mxu0 %v2244
    %v2263 = vpop.f32.mrf.mxu0
    %v2264 = vadd.f32 0.0, %v2263
    %2265 = vdwg.mxu0
    %2267 = vrot.lane.b32.xlu0 %v2264, 16
    %v2268 = vpop.permute.xlu0 %2267
    %v2270 = vsel %vm2000, %v2198, %v2268
    %v2271 = vadd.f32 %v2270, %v52
    %v2272 = vld [vmem:[%s12] sm:$0xff]
    %v2273 = vld [vmem:[%s13] sm:$0xff]
    %v2274 = vsel %vm445, %v2271, 0.0
    %2275 = vadd.xlane.f32.xlu0 %v2274
    %v2276 = vpop.xlane.xlu0 %2275
    %v2277 = vrot.slane %v2276, 4
    %v2278 = vadd.f32 %v2276, %v2277
    %v2279 = vrot.slane %v2278, 2
    %v2280 = vadd.f32 %v2278, %v2279
    %v2281 = vrot.slane %v2280, 1
    %v2282 = vadd.f32 %v2280, %v2281
    %s2283 = vtos %v2282
    %v2284 = vstv %s2283
    %v2285 = vrcp.pop 256.0
    %v2286 = vmul.f32 256.0, %v2285
    %v2287 = vsub.f32 1.0, %v2286
    %v2288 = vmul.f32 %v2285, %v2287
    %v2289 = vadd.f32 %v2285, %v2288
    %vm2290 = vweird.f32 %v2285
    %v2291 = vsel %vm2290, %v2285, %v2289
    %v2292 = vmul.f32 %v2284, %v2291
    %v2293 = vsub.f32 %v2271, %v2292
    %v2294 = vmul.f32 %v2293, %v2293
    %v2295 = vsel %vm445, %v2294, 0.0
    %2296 = vadd.xlane.f32.xlu0 %v2295
    %v2297 = vpop.xlane.xlu0 %2296
    %v2298 = vrot.slane %v2297, 4
    %v2299 = vadd.f32 %v2297, %v2298
    %v2300 = vrot.slane %v2299, 2
    %v2301 = vadd.f32 %v2299, %v2300
    %v2302 = vrot.slane %v2301, 1
    %v2303 = vadd.f32 %v2301, %v2302
    %s2304 = vtos %v2303
    %v2305 = vstv %s2304
    %v2306 = vmul.f32 %v2305, %v2291
    %v2307 = vadd.f32 %v2306, 1e-08
    %v2308 = vrsqrt.pop %v2307
    %v2309 = vmul.f32 %v2308, %v2307
    %v2310 = vmul.f32 %v2309, %v2308
    %v2311 = vmul.f32 0.5, %v2310
    %v2312 = vsub.f32 1.5, %v2311
    %v2313 = vmul.f32 %v2308, %v2312
    %vm2314 = vweird.f32 %v2307
    %vm2315 = vweird.f32 %v2308
    %vm2316 = vmor %vm2314, %vm2315
    %v2317 = vsel %vm2316, %v2308, %v2313
    %v2318 = vmul.f32 %v2293, %v2317
    %2320 = vset.pattern.permute.xlu0 0
    %2321 = vperm.xlu0 %2320, %v2272
    %v2322 = vpop.permute.xlu0 %2321
    %v2324 = vmul.f32 %v2318, %v2322
    %2326 = vset.pattern.permute.xlu0 0
    %2327 = vperm.xlu0 %2326, %v2273
    %v2328 = vpop.permute.xlu0 %2327
    %v2330 = vadd.f32 %v2324, %v2328
    %2331 = vst.msk [vmem:[#allocation2] sm:$0xff] %vm445, %v2330
    %v2332 = vmul.f32 %v2045, 0.25
    %v2334 = vsel %vm2000, %v2332, 0
    %v2337 = vsel %vm2000, %v2091, 0
    %2339 = vmatpush.xpose.msra.mxu0 0.0
    %2340 = vmatpush.xpose.msra.mxu0 0.0
    %2341 = vmatpush.xpose.msra.mxu0 0.0
    %2342 = vmatpush.xpose.msra.mxu0 0.0
    %2343 = vmatpush.xpose.msra.mxu0 0.0
    %2344 = vmatpush.xpose.msra.mxu0 0.0
    %2345 = vmatpush.xpose.msra.mxu0 0.0
    %2346 = vmatpush.xpose.msra.mxu0 0.0
    %2347 = vmatpush.xpose.msra.mxu0 0.0
    %2348 = vmatpush.xpose.msra.mxu0 0.0
    %2349 = vmatpush.xpose.msra.mxu0 0.0
    %2350 = vmatpush.xpose.msra.mxu0 0.0
    %2351 = vmatpush.xpose.msra.mxu0 0.0
    %2352 = vmatpush.xpose.msra.mxu0 0.0
    %2353 = vmatpush.xpose.msra.mxu0 0.0
    %2354 = vmatpush.xpose.msra.mxu0 %v2337
    %2355 = vmatmul.f32.gmra.mxu0 %v2334
    %v2356 = vpop.f32.mrf.mxu0
    %v2357 = vadd.f32 0.0, %v2356
    %2358 = vdwg.mxu0
    %v2359 = vsel %vm138, %v2357, -inf
    %2360 = vmax.xlane.f32.xlu0 %v2359
    %v2361 = vpop.xlane.xlu0 %2360
    %v2362 = vsub.f32 %v2357, %v2361
    %v2363 = vmul.f32 %v2362, 1.442695
    %v2364 = vpow.pop %v2363
    %v2365 = vsel %vm138, %v2364, 0.0
    %2366 = vadd.xlane.f32.xlu0 %v2365
    %v2367 = vpop.xlane.xlu0 %2366
    %v2368 = vrcp.pop %v2367
    %v2369 = vmul.f32 %v2364, %v2368
    %v2371 = vsel %vm138, %v2369, 0
    %2373 = vmatpush.msra.mxu0 0.0
    %2374 = vmatpush.msra.mxu0 0.0
    %2375 = vmatpush.msra.mxu0 0.0
    %2376 = vmatpush.msra.mxu0 0.0
    %2377 = vmatpush.msra.mxu0 0.0
    %2378 = vmatpush.msra.mxu0 0.0
    %2379 = vmatpush.msra.mxu0 0.0
    %2380 = vmatpush.msra.mxu0 0.0
    %2381 = vmatpush.msra.mxu0 0.0
    %2382 = vmatpush.msra.mxu0 0.0
    %2383 = vmatpush.msra.mxu0 0.0
    %2384 = vmatpush.msra.mxu0 0.0
    %2385 = vmatpush.msra.mxu0 0.0
    %2386 = vmatpush.msra.mxu0 0.0
    %2387 = vmatpush.msra.mxu0 0.0
    %2388 = vmatpush.msra.mxu0 %v2137
    %2389 = vmatmul.f32.gmra.mxu0 %v2371
    %v2390 = vpop.f32.mrf.mxu0
    %v2391 = vadd.f32 0.0, %v2390
    %2392 = vdwg.mxu0
    %2393 = vrot.lane.b32.xlu0 %v2332, 112
    %v2394 = vpop.permute.xlu0 %2393
    %2395 = vrot.lane.b32.xlu0 %v2091, 112
    %v2396 = vpop.permute.xlu0 %2395
    %v2397 = vsel %vm2000, %v2394, 0
    %v2399 = vsel %vm2000, %v2396, 0
    %2401 = vmatpush.xpose.msra.mxu0 0.0
    %2402 = vmatpush.xpose.msra.mxu0 0.0
    %2403 = vmatpush.xpose.msra.mxu0 0.0
    %2404 = vmatpush.xpose.msra.mxu0 0.0
    %2405 = vmatpush.xpose.msra.mxu0 0.0
    %2406 = vmatpush.xpose.msra.mxu0 0.0
    %2407 = vmatpush.xpose.msra.mxu0 0.0
    %2408 = vmatpush.xpose.msra.mxu0 0.0
    %2409 = vmatpush.xpose.msra.mxu0 0.0
    %2410 = vmatpush.xpose.msra.mxu0 0.0
    %2411 = vmatpush.xpose.msra.mxu0 0.0
    %2412 = vmatpush.xpose.msra.mxu0 0.0
    %2413 = vmatpush.xpose.msra.mxu0 0.0
    %2414 = vmatpush.xpose.msra.mxu0 0.0
    %2415 = vmatpush.xpose.msra.mxu0 0.0
    %2416 = vmatpush.xpose.msra.mxu0 %v2399
    %2417 = vmatmul.f32.gmra.mxu0 %v2397
    %v2418 = vpop.f32.mrf.mxu0
    %v2419 = vadd.f32 0.0, %v2418
    %2420 = vdwg.mxu0
    %v2421 = vsel %vm138, %v2419, -inf
    %2422 = vmax.xlane.f32.xlu0 %v2421
    %v2423 = vpop.xlane.xlu0 %2422
    %v2424 = vsub.f32 %v2419, %v2423
    %v2425 = vmul.f32 %v2424, 1.442695
    %v2426 = vpow.pop %v2425
    %v2427 = vsel %vm138, %v2426, 0.0
    %2428 = vadd.xlane.f32.xlu0 %v2427
    %v2429 = vpop.xlane.xlu0 %2428
    %v2430 = vrcp.pop %v2429
    %v2431 = vmul.f32 %v2426, %v2430
    %2433 = vrot.lane.b32.xlu0 %v2137, 112
    %v2434 = vpop.permute.xlu0 %2433
    %v2437 = vsel %vm138, %v2431, 0
    %2439 = vmatpush.msra.mxu0 0.0
    %2440 = vmatpush.msra.mxu0 0.0
    %2441 = vmatpush.msra.mxu0 0.0
    %2442 = vmatpush.msra.mxu0 0.0
    %2443 = vmatpush.msra.mxu0 0.0
    %2444 = vmatpush.msra.mxu0 0.0
    %2445 = vmatpush.msra.mxu0 0.0
    %2446 = vmatpush.msra.mxu0 0.0
    %2447 = vmatpush.msra.mxu0 0.0
    %2448 = vmatpush.msra.mxu0 0.0
    %2449 = vmatpush.msra.mxu0 0.0
    %2450 = vmatpush.msra.mxu0 0.0
    %2451 = vmatpush.msra.mxu0 0.0
    %2452 = vmatpush.msra.mxu0 0.0
    %2453 = vmatpush.msra.mxu0 0.0
    %2454 = vmatpush.msra.mxu0 %v2434
    %2455 = vmatmul.f32.gmra.mxu0 %v2437
    %v2456 = vpop.f32.mrf.mxu0
    %v2457 = vadd.f32 0.0, %v2456
    %2458 = vdwg.mxu0
    %2460 = vrot.lane.b32.xlu0 %v2457, 16
    %v2461 = vpop.permute.xlu0 %2460
    %v2463 = vsel %vm2000, %v2391, %v2461
    %v2464 = vadd.f32 %v2463, %v53
    %v2465 = vld [vmem:[%s12] sm:$0xff]
    %v2466 = vld [vmem:[%s13] sm:$0xff]
    %v2467 = vsel %vm445, %v2464, 0.0
    %2468 = vadd.xlane.f32.xlu0 %v2467
    %v2469 = vpop.xlane.xlu0 %2468
    %v2470 = vrot.slane %v2469, 4
    %v2471 = vadd.f32 %v2469, %v2470
    %v2472 = vrot.slane %v2471, 2
    %v2473 = vadd.f32 %v2471, %v2472
    %v2474 = vrot.slane %v2473, 1
    %v2475 = vadd.f32 %v2473, %v2474
    %s2476 = vtos %v2475
    %v2477 = vstv %s2476
    %v2478 = vmul.f32 %v2477, %v2291
    %v2479 = vsub.f32 %v2464, %v2478
    %v2480 = vmul.f32 %v2479, %v2479
    %v2481 = vsel %vm445, %v2480, 0.0
    %2482 = vadd.xlane.f32.xlu0 %v2481
    %v2483 = vpop.xlane.xlu0 %2482
    %v2484 = vrot.slane %v2483, 4
    %v2485 = vadd.f32 %v2483, %v2484
    %v2486 = vrot.slane %v2485, 2
    %v2487 = vadd.f32 %v2485, %v2486
    %v2488 = vrot.slane %v2487, 1
    %v2489 = vadd.f32 %v2487, %v2488
    %s2490 = vtos %v2489
    %v2491 = vstv %s2490
    %v2492 = vmul.f32 %v2491, %v2291
    %v2493 = vadd.f32 %v2492, 1e-08
    %v2494 = vrsqrt.pop %v2493
    %v2495 = vmul.f32 %v2494, %v2493
    %v2496 = vmul.f32 %v2495, %v2494
    %v2497 = vmul.f32 0.5, %v2496
    %v2498 = vsub.f32 1.5, %v2497
    %v2499 = vmul.f32 %v2494, %v2498
    %vm2500 = vweird.f32 %v2493
    %vm2501 = vweird.f32 %v2494
    %vm2502 = vmor %vm2500, %vm2501
    %v2503 = vsel %vm2502, %v2494, %v2499
    %v2504 = vmul.f32 %v2479, %v2503
    %2506 = vset.pattern.permute.xlu0 0
    %2507 = vperm.xlu0 %2506, %v2465
    %v2508 = vpop.permute.xlu0 %2507
    %v2510 = vmul.f32 %v2504, %v2508
    %2512 = vset.pattern.permute.xlu0 0
    %2513 = vperm.xlu0 %2512, %v2466
    %v2514 = vpop.permute.xlu0 %2513
    %v2516 = vadd.f32 %v2510, %v2514
    %s2517 = scalar_lea.vmem [#allocation2], 8
    %2518 = vst.msk [vmem:[%s2517] sm:$0xff] %vm445, %v2516
    // Predicated region
    $region58: #{tpu_custom_call.1} parent=1 // pred_check
      _
    $region59: #{tpu_custom_call.1} parent=1 // pred_check_branch
      %2520 = sbr.rel (0) target = $region61
    $region60: #{tpu_custom_call.1} parent=1 // pred_region
      %2522 = vsyncadd [#allocation3], 0
      %s2523 = sshll.u32 [#allocation2], 4
      %s2524 = int_to_ptr.vmem [resolvable:$true] %s2523
      %s2525 = sshll.u32 %s14, 4
      %s2526 = int_to_ptr.hbm [resolvable:$true] %s2525
      %2531 = dma.vmem_to_hbm [thread:$0]  %s2524, 256, %s2526, [#allocation3], 128, 128, 8
    $region61: #{tpu_custom_call.1} parent=1 // pred_fallthru
      _
    // Predicated region
    $region62: #{tpu_custom_call.1} parent=1 // pred_check
      _
    $region63: #{tpu_custom_call.1} parent=1 // pred_check_branch
      %2533 = sbr.rel (0) target = $region65
    $region64: #{tpu_custom_call.1} parent=1 // pred_region
      %2535 = dma.done [#allocation3], 256
    $region65: #{tpu_custom_call.1} parent=1 // pred_fallthru
      _
    %2536 = vsyncpa [#allocation3], 1

</llo_original>
